<compile_context>
chip_gen: v7x
topology: tpu7x:2x2x1
jax: 0.10.0
libtpu: 0.0.40
codegen_flags: <defaults>
</compile_context>

<pallas_src>
import functools

import jax
import jax.numpy as jnp
import numpy as np
from jax.experimental import pallas as pl
from jax.experimental.pallas import tpu as pltpu

_MASK_VALUE = -1e30   # logsumexp-neutral fill (finite: avoids inf-inf NaNs)


# ----------------------------- tile sizing ---------------------------------- #
def _round_up(x: int, m: int) -> int:
    return ((x + m - 1) // m) * m


def _vmem_capacity_bytes() -> int:
    try:
        return int(pltpu.get_tpu_info().vmem_capacity_bytes)
    except Exception:
        return 64 * 1024 * 1024      # conservative fallback: v7x per-core VMEM


def _choose_tiles(M: int, V: int, D: int, vocab_tile=None):
    """Generation-aware tile sizing driven by this chip's VMEM capacity."""
    vmem_cap = _vmem_capacity_bytes()
    vmem_limit = min(int(0.75 * vmem_cap), 96 * 1024 * 1024)

    # Row tile: 256 rows fills the v6e/v7x MXU row dimension.
    # TODO(synk): drop to 128 on v5e (4x128 MXU) via a chip-version query.
    tm = 256 if _round_up(M, 128) >= 256 else 128
    m_pad = _round_up(M, tm)

    if vocab_tile is None:
        # Start large (amortizes ~0.35us/grid-step + DMA setup on the streamed
        # W operand), shrink until the double-buffered working set fits VMEM.
        tv = 2048
        budget = int(0.6 * vmem_limit)
        while tv > 128:
            need = (2 * tv * D * 2          # bf16 W tile, double-buffered
                    + 2 * tv * 128 * 4      # f32 bias tile (lane-padded), x2
                    + 2 * D * tm * 2        # bf16 activation tile, x2
                    + 2 * tv * tm * 4)      # live f32 logits tile (+ slack)
            if need <= budget:
                break
            tv //= 2
    else:
        tv = _round_up(int(vocab_tile), 128)
    tv = max(128, min(tv, _round_up(V, 128)))
    v_pad = _round_up(V, tv)
    return tm, m_pad, tv, v_pad, vmem_limit


# ----------------------------- Pallas kernel -------------------------------- #
def _spin_logprob_kernel(emb_ref, w_ref, bias_ref, tok_ref, out_ref,
                         m_sc, s_sc, t_sc):
    """grid = (model k [parallel], row tile m [parallel], vocab tile v [arbitrary]).

    emb_ref : (1, D, TM)    bf16  gathered embeddings, transposed (rows in lanes)
    w_ref   : (1, TV, D)    bf16  transposed projection tile of this model
    bias_ref: (1, TV, 1)    f32   (padded vocab columns hold -1e30)
    tok_ref : (1, TM)       i32   token ids of this row tile (lane-dense)
    out_ref : (1, 1, 8, TM) f32   per-position token log-prob (lane-dense)
    m_sc/s_sc/t_sc : (1, TM) f32  running max / scaled sum-exp / token logit
    """
    v_idx = pl.program_id(2)
    n_v = pl.num_programs(2)
    tv = w_ref.shape[1]
    tm = tok_ref.shape[1]

    @pl.when(v_idx == 0)
    def _():
        m_sc[...] = jnp.full(m_sc.shape, _MASK_VALUE, jnp.float32)
        s_sc[...] = jnp.zeros(s_sc.shape, jnp.float32)
        t_sc[...] = jnp.zeros(t_sc.shape, jnp.float32)

    # Transposed output projection for this vocab tile (MXU, bf16 in / f32 acc):
    # (TV, D) @ (D, TM) -> (TV, TM): vocab on sublanes, positions on lanes, so
    # every per-position reduction below is lane-dense.
    logits = jnp.dot(w_ref[0], emb_ref[0], preferred_element_type=jnp.float32)
    logits = logits + bias_ref[0]                                  # (TV,1) bcast

    # Raw logit at the observed token id: compare against LOCAL ids (a cheap
    # (1, TM) subtraction instead of a full-tile iota + add every vocab step).
    tok_local = tok_ref[...] - v_idx * tv                          # (1, TM)
    col = jax.lax.broadcasted_iota(jnp.int32, (tv, tm), 0)         # sublane ids
    t_sc[...] += jnp.sum(jnp.where(col == tok_local, logits, 0.0),
                         axis=0, keepdims=True)

    # Streaming logsumexp across vocab tiles (full log-softmax never built).
    m_prev = m_sc[...]
    m_new = jnp.maximum(m_prev, jnp.max(logits, axis=0, keepdims=True))
    s_sc[...] = (s_sc[...] * jnp.exp(m_prev - m_new)
                 + jnp.sum(jnp.exp(logits - m_new), axis=0, keepdims=True))
    m_sc[...] = m_new

    @pl.when(v_idx == n_v - 1)
    def _():
        lse = m_sc[...] + jnp.log(s_sc[...])                       # (1, TM)
        logp = t_sc[...] - lse                                     # (1, TM)
        out_ref[...] = jnp.broadcast_to(logp[None, None], out_ref.shape)


def _token_logprob_pallas(emb_t, w_t, bias, tok_pad, *, tm, tv, vmem_limit):
    """emb_t: (2, D, M_pad) bf16; w_t: (2, V_pad, D) bf16; bias: (2, V_pad, 1) f32;
    tok_pad: (1, M_pad) i32.  Returns (2, M_pad) f32 per-position token log-probs."""
    K, D, m_pad = emb_t.shape
    v_pad = w_t.shape[1]
    n_m = m_pad // tm
    n_v = v_pad // tv

    out = pl.pallas_call(
        _spin_logprob_kernel,
        out_shape=jax.ShapeDtypeStruct((K, n_m, 8, tm), jnp.float32),
        grid=(K, n_m, n_v),
        in_specs=[
            pl.BlockSpec((1, D, tm), lambda k, m, v: (k, 0, m)),   # activations
            pl.BlockSpec((1, tv, D), lambda k, m, v: (k, v, 0)),   # W (streamed)
            pl.BlockSpec((1, tv, 1), lambda k, m, v: (k, v, 0)),   # bias
            pl.BlockSpec((1, tm), lambda k, m, v: (0, m)),         # token ids
        ],
        out_specs=pl.BlockSpec((1, 1, 8, tm), lambda k, m, v: (k, m, 0, 0)),
        scratch_shapes=[
            pltpu.VMEM((1, tm), jnp.float32),   # running max
            pltpu.VMEM((1, tm), jnp.float32),   # scaled sum-exp
            pltpu.VMEM((1, tm), jnp.float32),   # token-logit accumulator
        ],
        compiler_params=pltpu.CompilerParams(
            dimension_semantics=("parallel", "parallel", "arbitrary"),
            vmem_limit_bytes=vmem_limit,
        ),
    )(emb_t, w_t, bias, tok_pad)
    return out[:, :, 0, :].reshape(K, n_m * tm)


# ----------------------------- SPIN forward ---------------------------------- #
def spin_forward(generated_seq, real_seq, prompt_len, policy_params, ref_params,
                 lam=0.1, pad_id=0, vocab_tile=None):
    """Reproduces SPIN.forward (eq. 4.7 of arXiv:2401.01335v1).

    Returns (loss, (4, b) masked-mean log-probs
             [policy_gen, policy_real, ref_gen, ref_real])."""
    b, n = generated_seq.shape
    V, D = policy_params["embed"].shape

    # pad-token handling (pad_id path of the PyTorch module)
    gen_keep = generated_seq != pad_id
    real_keep = real_seq != pad_id
    gen_seq = jnp.where(gen_keep, generated_seq, 0).astype(jnp.int32)
    real_seq_c = jnp.where(real_keep, real_seq, 0).astype(jnp.int32)

    # prompt masks: arange(n) < prompt_len[:, None]
    prompt_mask = jnp.arange(n)[None, :] < prompt_len[:, None]
    gen_mask = (gen_keep & jnp.logical_not(prompt_mask)).astype(jnp.float32)
    real_mask = (real_keep & jnp.logical_not(prompt_mask)).astype(jnp.float32)

    # Fused row axis shared by both models: rows = [generated(b); real(b)].
    tok = jnp.concatenate([gen_seq, real_seq_c], axis=0)          # (2b, n)
    mask = jnp.concatenate([gen_mask, real_mask], axis=0)         # (2b, n)
    tok_flat = tok.reshape(-1)                                    # (M,)
    M = 2 * b * n

    tm, m_pad, tv, v_pad, vmem_limit = _choose_tiles(M, V, D, vocab_tile)

    tok_pad = jnp.zeros((1, m_pad), jnp.int32).at[0, :M].set(tok_flat)

    # Gathered activations, transposed to (D, M_pad) so kernel rows sit in lanes.
    # TODO(synk): move this gather in-kernel (manual DMA gather from the (V, D)
    # table) to avoid materializing activations in HBM.
    def build_emb(embed):
        e = embed[tok_flat].astype(jnp.bfloat16)                  # (M, D)
        e = jnp.pad(e, ((0, m_pad - M), (0, 0)))
        return e.T                                                # (D, M_pad)

    # Transposed projection; padded vocab columns are logsumexp-neutral
    # (zero weights, -1e30 bias) and can never match a real token id.
    def build_w(w):                                               # (D,V)->(V_pad,D)
        return jnp.pad(w.T.astype(jnp.bfloat16), ((0, v_pad - V), (0, 0)))

    def build_bias(bvec):                                         # (V,)->(V_pad,1)
        return jnp.pad(bvec.astype(jnp.float32), (0, v_pad - V),
                       constant_values=_MASK_VALUE)[:, None]

    emb_t = jnp.stack([build_emb(policy_params["embed"]),
                       build_emb(ref_params["embed"])])           # (2, D, M_pad)
    w_t = jnp.stack([build_w(policy_params["w"]),
                     build_w(ref_params["w"])])                   # (2, V_pad, D)
    bias = jnp.stack([build_bias(policy_params["b"]),
                      build_bias(ref_params["b"])])               # (2, V_pad, 1)

    lp_pos = _token_logprob_pallas(emb_t, w_t, bias, tok_pad,
                                   tm=tm, tv=tv, vmem_limit=vmem_limit)
    lp_pos = lp_pos[:, :M].reshape(2, 2 * b, n)                   # (model,row,pos)

    # masked mean over (non-prompt, non-pad) positions — tiny plain-JAX glue
    num = jnp.sum(lp_pos * mask[None], axis=-1)                   # (2, 2b)
    den = jnp.sum(mask, axis=-1)                                  # (2b,)
    mean = jnp.where(den > 0.0, num / jnp.maximum(den, 1.0), 0.0) # (2, 2b)
    lp = mean.reshape(2, 2, b)

    policy_gen, policy_real = lp[0, 0], lp[0, 1]
    ref_gen, ref_real = lp[1, 0], lp[1, 1]
    losses = -jax.nn.log_sigmoid(
        lam * ((policy_real - ref_real) - (policy_gen - ref_gen)))
    lp4 = jnp.stack([policy_gen, policy_real, ref_gen, ref_real])
    return losses.mean(), lp4


# ----------------------------- pure-JAX reference ---------------------------- #
def _ref_masked_logprob(embed, w, bias, seq, mask_f32):
    logits = jnp.einsum("bnd,dv->bnv", embed[seq], w,
                        precision=jax.lax.Precision.HIGHEST) + bias
    logp = jax.nn.log_softmax(logits, axis=-1)
    tok_logp = jnp.take_along_axis(logp, seq[..., None], axis=-1)[..., 0]
    num = jnp.sum(tok_logp * mask_f32, axis=-1)
    den = jnp.sum(mask_f32, axis=-1)
    return jnp.where(den > 0.0, num / jnp.maximum(den, 1.0), 0.0)


# --------------------------------- main -------------------------------------- #
if __name__ == "__main__":
    B, N, D, V = 2, 96, 128, 1000   # V not a multiple of the tile -> pad path
    LAM = 0.1
    PAD_ID = 0

    key = jax.random.PRNGKey(0)
    ks = jax.random.split(key, 6)

    policy_params = {
        "embed": 0.02 * jax.random.normal(ks[0], (V, D), jnp.float32),
        "w": 0.02 * jax.random.normal(ks[1], (D, V), jnp.float32),
        "b": jnp.zeros((V,), jnp.float32),
    }
    # Reference ("EMA") model params: a second deterministic init.
    # TODO(synk): the EMA update machinery of the wrapped EMA module is training
    # state management, not forward compute.
    ref_params = {
        "embed": 0.02 * jax.random.normal(ks[2], (V, D), jnp.float32),
        "w": 0.02 * jax.random.normal(ks[3], (D, V), jnp.float32),
        "b": jnp.zeros((V,), jnp.float32),
    }

    generated_seq = jax.random.randint(ks[4], (B, N), 1, V, dtype=jnp.int32)
    real_seq = jax.random.randint(ks[5], (B, N), 1, V, dtype=jnp.int32)
    generated_seq = generated_seq.at[:, -3:].set(PAD_ID)   # tail padding
    real_seq = real_seq.at[0, -5:].set(PAD_ID)
    prompt_len = jnp.array([5, 7], dtype=jnp.int32)

    # vocab_tile=256 keeps several vocab tiles at this toy V so the streaming
    # logsumexp + padded-last-tile + multi-row-tile paths are all exercised;
    # the production default (vocab_tile=None) auto-sizes 512-2048 from the
    # chip's VMEM capacity.
    fwd = jax.jit(functools.partial(spin_forward, lam=LAM, pad_id=PAD_ID,
                                    vocab_tile=256))
    loss, lp = fwd(generated_seq, real_seq, prompt_len, policy_params, ref_params)
    loss = jax.block_until_ready(loss)
    lp = jax.block_until_ready(lp)

    # --- pure-JAX reference check ---
    gen_keep = generated_seq != PAD_ID
    real_keep = real_seq != PAD_ID
    gen_seq = jnp.where(gen_keep, generated_seq, 0)
    real_seq_c = jnp.where(real_keep, real_seq, 0)
    prompt_mask = jnp.arange(N)[None, :] < prompt_len[:, None]
    gen_mask = (gen_keep & ~prompt_mask).astype(jnp.float32)
    real_mask = (real_keep & ~prompt_mask).astype(jnp.float32)

    ref_lp = jnp.stack([
        _ref_masked_logprob(policy_params["embed"], policy_params["w"],
                            policy_params["b"], gen_seq, gen_mask),
        _ref_masked_logprob(policy_params["embed"], policy_params["w"],
                            policy_params["b"], real_seq_c, real_mask),
        _ref_masked_logprob(ref_params["embed"], ref_params["w"],
                            ref_params["b"], gen_seq, gen_mask),
        _ref_masked_logprob(ref_params["embed"], ref_params["w"],
                            ref_params["b"], real_seq_c, real_mask),
    ])
    ref_loss = jnp.mean(-jax.nn.log_sigmoid(
        LAM * ((ref_lp[1] - ref_lp[3]) - (ref_lp[0] - ref_lp[2]))))

    np.testing.assert_allclose(np.asarray(lp), np.asarray(ref_lp),
                               rtol=1e-2, atol=1e-2)
    np.testing.assert_allclose(float(loss), float(ref_loss),
                               rtol=1e-2, atol=1e-2)
    print("KERNEL_OK")
</pallas_src>

<mosaic_0001>
module attributes {stable_mosaic.version = 11 : i64} {
  func.func @_spin_logprob_kernel(%arg0: i32, %arg1: i32, %arg2: i32, %arg3: memref<1x128x256xbf16, #tpu.memory_space<vmem>>, %arg4: memref<1x256x128xbf16, #tpu.memory_space<vmem>>, %arg5: memref<1x256x1xf32, #tpu.memory_space<vmem>>, %arg6: memref<1x256xi32, #tpu.memory_space<vmem>>, %arg7: memref<1x1x8x256xf32, #tpu.memory_space<vmem>>, %arg8: memref<1x256xf32, #tpu.memory_space<vmem>>, %arg9: memref<1x256xf32, #tpu.memory_space<vmem>>, %arg10: memref<1x256xf32, #tpu.memory_space<vmem>>) attributes {dimension_semantics = [#tpu.dimension_semantics<parallel>, #tpu.dimension_semantics<parallel>, #tpu.dimension_semantics<arbitrary>], iteration_bounds = array<i64: 2, 2, 4>, scalar_prefetch = 0 : i64, scratch_operands = 3 : i64, tpu.core_type = #tpu.core_type<tc>, window_params = [{transform_indices = @transform_0, window_bounds = array<i64: 1, 128, 256>}, {transform_indices = @transform_1, window_bounds = array<i64: 1, 256, 128>}, {transform_indices = @transform_2, window_bounds = array<i64: 1, 256, 1>}, {transform_indices = @transform_3, window_bounds = array<i64: 1, 256>}, {transform_indices = @transform_4, window_bounds = array<i64: 1, 1, 8, 256>}]} {
    %c0_i32 = arith.constant 0 : i32
    %0 = arith.cmpi eq, %arg2, %c0_i32 : i32
    %1 = arith.extui %0 : i1 to i32
    %c0_i32_0 = arith.constant 0 : i32
    %2 = arith.cmpi ne, %1, %c0_i32_0 : i32
    scf.if %2 {
      %cst_28 = arith.constant -1.000000e+30 : f32
      %45 = vector.broadcast %cst_28 : f32 to vector<1x256xf32>
      %c0_29 = arith.constant 0 : index
      %c0_30 = arith.constant 0 : index
      %46 = vector.load %arg8[%c0_29, %c0_30] : memref<1x256xf32, #tpu.memory_space<vmem>>, vector<1x256xf32>
      tpu.vector_store %arg8[%c0_29, %c0_30], %45 {strides = array<i32>} : memref<1x256xf32, #tpu.memory_space<vmem>>, vector<1x256xf32>,
      %cst_31 = arith.constant 0.000000e+00 : f32
      %47 = vector.broadcast %cst_31 : f32 to vector<1x256xf32>
      %c0_32 = arith.constant 0 : index
      %c0_33 = arith.constant 0 : index
      %48 = vector.load %arg9[%c0_32, %c0_33] : memref<1x256xf32, #tpu.memory_space<vmem>>, vector<1x256xf32>
      tpu.vector_store %arg9[%c0_32, %c0_33], %47 {strides = array<i32>} : memref<1x256xf32, #tpu.memory_space<vmem>>, vector<1x256xf32>,
      %cst_34 = arith.constant 0.000000e+00 : f32
      %49 = vector.broadcast %cst_34 : f32 to vector<1x256xf32>
      %c0_35 = arith.constant 0 : index
      %c0_36 = arith.constant 0 : index
      %50 = vector.load %arg10[%c0_35, %c0_36] : memref<1x256xf32, #tpu.memory_space<vmem>>, vector<1x256xf32>
      tpu.vector_store %arg10[%c0_35, %c0_36], %49 {strides = array<i32>} : memref<1x256xf32, #tpu.memory_space<vmem>>, vector<1x256xf32>,
    } else {
    }
    %c0 = arith.constant 0 : index
    %c0_1 = arith.constant 0 : index
    %c0_2 = arith.constant 0 : index
    %3 = vector.load %arg4[%c0, %c0_1, %c0_2] : memref<1x256x128xbf16, #tpu.memory_space<vmem>>, vector<1x256x128xbf16>
    %4 = vector.shape_cast %3 : vector<1x256x128xbf16> to vector<256x128xbf16>
    %c0_3 = arith.constant 0 : index
    %c0_4 = arith.constant 0 : index
    %c0_5 = arith.constant 0 : index
    %5 = vector.load %arg3[%c0_3, %c0_4, %c0_5] : memref<1x128x256xbf16, #tpu.memory_space<vmem>>, vector<1x128x256xbf16>
    %6 = vector.shape_cast %5 : vector<1x128x256xbf16> to vector<128x256xbf16>
    %cst = arith.constant dense<0.000000e+00> : vector<256x256xf32>
    %7 = tpu.matmul %4, %6, %cst {dimension_numbers = #tpu.dot_dimension_numbers<[1], [0], [0], [1], [0, 0, 1, 1], [], []>} : vector<256x128xbf16>, vector<128x256xbf16>, vector<256x256xf32> -> vector<256x256xf32>
    %c0_6 = arith.constant 0 : index
    %c0_7 = arith.constant 0 : index
    %c0_8 = arith.constant 0 : index
    %8 = vector.load %arg5[%c0_6, %c0_7, %c0_8] : memref<1x256x1xf32, #tpu.memory_space<vmem>>, vector<1x256x1xf32>
    %9 = vector.shape_cast %8 : vector<1x256x1xf32> to vector<256x1xf32>
    %10 = vector.broadcast %9 : vector<256x1xf32> to vector<256x256xf32>
    %11 = arith.addf %7, %10 : vector<256x256xf32>
    %c0_9 = arith.constant 0 : index
    %c0_10 = arith.constant 0 : index
    %12 = vector.load %arg6[%c0_9, %c0_10] : memref<1x256xi32, #tpu.memory_space<vmem>>, vector<1x256xi32>
    %c256_i32 = arith.constant 256 : i32
    %13 = arith.muli %arg2, %c256_i32 : i32
    %14 = vector.broadcast %13 : i32 to vector<1x256xi32>
    %15 = arith.subi %12, %14 : vector<1x256xi32>
    %16 = tpu.iota {dimensions = array<i32: 0>} : vector<256x256xi32>
    %c0_11 = arith.constant 0 : index
    %c0_12 = arith.constant 0 : index
    %17 = vector.load %arg10[%c0_11, %c0_12] : memref<1x256xf32, #tpu.memory_space<vmem>>, vector<1x256xf32>
    %18 = vector.broadcast %15 : vector<1x256xi32> to vector<256x256xi32>
    %19 = arith.cmpi eq, %16, %18 : vector<256x256xi32>
    %cst_13 = arith.constant 0.000000e+00 : f32
    %20 = vector.broadcast %cst_13 : f32 to vector<256x256xf32>
    %21 = arith.select %19, %11, %20 : vector<256x256xi1>, vector<256x256xf32>
    %cst_14 = arith.constant dense<0.000000e+00> : vector<256xf32>
    %22 = vector.multi_reduction <add>, %21, %cst_14 [0] : vector<256x256xf32> to vector<256xf32>
    %23 = vector.shape_cast %22 : vector<256xf32> to vector<1x256xf32>
    %24 = arith.addf %17, %23 : vector<1x256xf32>
    %c0_15 = arith.constant 0 : index
    %c0_16 = arith.constant 0 : index
    %25 = vector.load %arg10[%c0_15, %c0_16] : memref<1x256xf32, #tpu.memory_space<vmem>>, vector<1x256xf32>
    tpu.vector_store %arg10[%c0_15, %c0_16], %24 {strides = array<i32>} : memref<1x256xf32, #tpu.memory_space<vmem>>, vector<1x256xf32>,
    %c0_17 = arith.constant 0 : index
    %c0_18 = arith.constant 0 : index
    %26 = vector.load %arg8[%c0_17, %c0_18] : memref<1x256xf32, #tpu.memory_space<vmem>>, vector<1x256xf32>
    %cst_19 = arith.constant dense<0xFF800000> : vector<256xf32>
    %27 = vector.multi_reduction <maximumf>, %11, %cst_19 [0] : vector<256x256xf32> to vector<256xf32>
    %28 = vector.shape_cast %27 : vector<256xf32> to vector<1x256xf32>
    %29 = arith.maximumf %26, %28 : vector<1x256xf32>
    %c0_20 = arith.constant 0 : index
    %c0_21 = arith.constant 0 : index
    %30 = vector.load %arg9[%c0_20, %c0_21] : memref<1x256xf32, #tpu.memory_space<vmem>>, vector<1x256xf32>
    %31 = arith.subf %26, %29 : vector<1x256xf32>
    %32 = math.exp %31 : vector<1x256xf32>
    %33 = arith.mulf %30, %32 : vector<1x256xf32>
    %34 = vector.broadcast %29 : vector<1x256xf32> to vector<256x256xf32>
    %35 = arith.subf %11, %34 : vector<256x256xf32>
    %36 = math.exp %35 : vector<256x256xf32>
    %cst_22 = arith.constant dense<0.000000e+00> : vector<256xf32>
    %37 = vector.multi_reduction <add>, %36, %cst_22 [0] : vector<256x256xf32> to vector<256xf32>
    %38 = vector.shape_cast %37 : vector<256xf32> to vector<1x256xf32>
    %39 = arith.addf %33, %38 : vector<1x256xf32>
    %c0_23 = arith.constant 0 : index
    %c0_24 = arith.constant 0 : index
    %40 = vector.load %arg9[%c0_23, %c0_24] : memref<1x256xf32, #tpu.memory_space<vmem>>, vector<1x256xf32>
    tpu.vector_store %arg9[%c0_23, %c0_24], %39 {strides = array<i32>} : memref<1x256xf32, #tpu.memory_space<vmem>>, vector<1x256xf32>,
    %c0_25 = arith.constant 0 : index
    %c0_26 = arith.constant 0 : index
    %41 = vector.load %arg8[%c0_25, %c0_26] : memref<1x256xf32, #tpu.memory_space<vmem>>, vector<1x256xf32>
    tpu.vector_store %arg8[%c0_25, %c0_26], %29 {strides = array<i32>} : memref<1x256xf32, #tpu.memory_space<vmem>>, vector<1x256xf32>,
    %c3_i32 = arith.constant 3 : i32
    %42 = arith.cmpi eq, %arg2, %c3_i32 : i32
    %43 = arith.extui %42 : i1 to i32
    %c0_i32_27 = arith.constant 0 : i32
    %44 = arith.cmpi ne, %43, %c0_i32_27 : i32
    scf.if %44 {
      %c0_28 = arith.constant 0 : index
      %c0_29 = arith.constant 0 : index
      %45 = vector.load %arg8[%c0_28, %c0_29] : memref<1x256xf32, #tpu.memory_space<vmem>>, vector<1x256xf32>
      %c0_30 = arith.constant 0 : index
      %c0_31 = arith.constant 0 : index
      %46 = vector.load %arg9[%c0_30, %c0_31] : memref<1x256xf32, #tpu.memory_space<vmem>>, vector<1x256xf32>
      %47 = math.log %46 : vector<1x256xf32>
      %48 = arith.addf %45, %47 : vector<1x256xf32>
      %c0_32 = arith.constant 0 : index
      %c0_33 = arith.constant 0 : index
      %49 = vector.load %arg10[%c0_32, %c0_33] : memref<1x256xf32, #tpu.memory_space<vmem>>, vector<1x256xf32>
      %50 = arith.subf %49, %48 : vector<1x256xf32>
      %51 = vector.shape_cast %50 : vector<1x256xf32> to vector<1x1x1x256xf32>
      %52 = vector.shape_cast %51 : vector<1x1x1x256xf32> to vector<1x1x1x256xf32>
      %53 = vector.broadcast %52 : vector<1x1x1x256xf32> to vector<1x1x8x256xf32>
      %c0_34 = arith.constant 0 : index
      %c0_35 = arith.constant 0 : index
      %c0_36 = arith.constant 0 : index
      %c0_37 = arith.constant 0 : index
      %54 = vector.load %arg7[%c0_34, %c0_35, %c0_36, %c0_37] : memref<1x1x8x256xf32, #tpu.memory_space<vmem>>, vector<1x1x8x256xf32>
      tpu.vector_store %arg7[%c0_34, %c0_35, %c0_36, %c0_37], %53 {strides = array<i32>} : memref<1x1x8x256xf32, #tpu.memory_space<vmem>>, vector<1x1x8x256xf32>,
    } else {
    }
    return
  }
  func.func @transform_0(%arg0: i32, %arg1: i32, %arg2: i32) -> (i32, i32, i32) {
    %c0_i32 = arith.constant 0 : i32
    %c0_i32_0 = arith.constant 0 : i32
    return %arg0, %c0_i32, %arg1 : i32, i32, i32
  }
  func.func @transform_1(%arg0: i32, %arg1: i32, %arg2: i32) -> (i32, i32, i32) {
    %c0_i32 = arith.constant 0 : i32
    %c0_i32_0 = arith.constant 0 : i32
    return %arg0, %arg2, %c0_i32 : i32, i32, i32
  }
  func.func @transform_2(%arg0: i32, %arg1: i32, %arg2: i32) -> (i32, i32, i32) {
    %c0_i32 = arith.constant 0 : i32
    %c0_i32_0 = arith.constant 0 : i32
    return %arg0, %arg2, %c0_i32 : i32, i32, i32
  }
  func.func @transform_3(%arg0: i32, %arg1: i32, %arg2: i32) -> (i32, i32) {
    %c0_i32 = arith.constant 0 : i32
    %c0_i32_0 = arith.constant 0 : i32
    return %c0_i32, %arg1 : i32, i32
  }
  func.func @transform_4(%arg0: i32, %arg1: i32, %arg2: i32) -> (i32, i32, i32, i32) {
    %c0_i32 = arith.constant 0 : i32
    %c0_i32_0 = arith.constant 0 : i32
    %c0_i32_1 = arith.constant 0 : i32
    return %arg0, %arg1, %c0_i32, %c0_i32_0 : i32, i32, i32, i32
  }
}

</mosaic_0001>

<llo_original>
// kernel: spin_forward.1
$region0: #{spin_forward.1}
  #allocation0 [shape = 'u32[]', space=smem, size = 0x4, offset = 0x4, fixed_abs, tag = 'smem constant byte address 0x4 - core index']
  #allocation1 [shape = 'u32[144,128]{1,0:T(1,128)}', space=vmem, size = 0x12000, scoped, tag = 'internal scratch']
  #allocation2 [shape = 'f32[1,256]{1,0:T(1,128)}', space=vmem, size = 0x400, scoped, tag = 'scratch operand']
  #allocation3 [shape = 'f32[1,256]{1,0:T(1,128)}', space=vmem, size = 0x400, scoped, tag = 'scratch operand']
  #allocation4 [shape = 'f32[1,256]{1,0:T(1,128)}', space=vmem, size = 0x400, scoped, tag = 'scratch operand']
  %s0 = inlined_call_operand.vmem [shape: bf16[2,128,512], index: 0, kind: input, shape index: {}]
  %s1 = inlined_call_operand.vmem [shape: bf16[2,1024,128], index: 1, kind: input, shape index: {}]
  %s2 = inlined_call_operand.vmem [shape: f32[2,1024,1], index: 2, kind: input, shape index: {}]
  %s3 = inlined_call_operand.vmem [shape: s32[1,512], index: 3, kind: input, shape index: {}]
  %s4 = inlined_call_operand.vmem [shape: f32[2,2,8,256], index: 4, kind: output, shape index: {}]
  %s5 = sld [smem:[#allocation0]]
  $region95: #{spin_forward.1} parent=0
    _
  %s7 = ssub.s32 1, %s5
  %s8 = scalar_select 0, %s7, %s5
  $region1: #{spin_forward.1} parent=0
    #allocation5 [shape = 'u8[131072]{0}', space=vmem, size = 0x20000, scoped, tag = 'input window, operand 0']
    loop: start=0, step=1, limit=18
    $region2: #{spin_forward.1} parent=1 // loop_pre_header
      _
    $region3: #{spin_forward.1} parent=1 // loop_header
      %s10 = sphi 0, %s14
      %p11 = scmp.ge.s32.totalorder %s10, 18
      %s17 = sphi 0, %s36
      %s18 = sphi 0, %s32
      %s19 = sphi 0, %s28
      %s20 = sphi 0, %s17
      %s21 = sphi 0, %s18
      %s22 = sphi 0, %s19
      %s23 = sphi 0, %s20
      %s24 = sphi 0, %s21
      %s25 = sphi 0, %s22
      %s41 = sphi 0, %s43
      %s44 = sphi 0, %s41
      %s45 = sphi 0, %s44
      %s61 = sphi 0, %s45
      %s69 = sphi 0, %s71
      %s72 = sphi 0, %s69
      %s73 = sphi 0, %s72
      %s89 = sphi 0, %s73
      %s97 = sphi 0, %s99
      %s100 = sphi 0, %s97
      %s101 = sphi 0, %s100
      %s117 = sphi 0, %s101
      %s123 = sphi 0, %s125
      %s126 = sphi 0, %s123
      %s127 = sphi 0, %s126
      %s143 = sphi 0, %s127
      %s151 = sphi 0, %s153
      %s154 = sphi 0, %s151
      %s155 = sphi 0, %s154
      %s171 = sphi 0, %s155
    $region4: #{spin_forward.1} parent=1 // loop_header_branch
      %13 = sbr.rel (%p11) target = $region8
    $region5: #{spin_forward.1} parent=1 // loop_body
      %s15 = ssub.s32 %s10, 1
      %s16 = ssub.s32 %s10, 2
      %s26 = sadd.s32 1, %s19
      %p27 = scmp.ge.s32.totalorder %s26, 4
      %s28 = scalar_select %p27, 0, %s26
      %s29 = sadd.s32 1, %s18
      %s30 = scalar_select %p27, %s29, %s18
      %p31 = scmp.ge.s32.totalorder %s30, 2
      %s32 = scalar_select %p31, 0, %s30
      %s33 = sadd.s32 1, %s17
      %s34 = scalar_select %p31, %s33, %s17
      %p35 = scmp.ge.s32.totalorder %s34, 2
      %s36 = scalar_select %p35, 0, %s34
      %s37 = ssub.s32 %s17, %s36
      %s38 = ssub.s32 %s18, %s32
      %s39 = sor.u32 %s37, %s38
      %p40 = scmp.eq.s32.totalorder %s39, 0
      %s42 = sadd.s32 %s41, 1
      %s43 = scalar_select %p40, %s41, %s42
      %p46 = pneg %p40
      %p47 = scmp.eq.s32.totalorder %s10, 15
      %p48 = por %p46, %p47
      %p49 = scmp.ne.s32.totalorder %s41, %s44
      %p50 = scmp.eq.s32.totalorder %s10, 0
      %p51 = por %p49, %p50
      %p52 = scmp.ne.s32.totalorder %s41, %s44
      %p53 = scmp.eq.s32.totalorder %s15, 15
      %p54 = por %p52, %p53
      %p55 = scmp.ne.s32.totalorder %s44, %s45
      %p56 = scmp.eq.s32.totalorder %s15, 0
      %p57 = por %p55, %p56
      %p58 = scmp.ne.s32.totalorder %s44, %s45
      %p59 = scmp.eq.s32.totalorder %s16, 15
      %p60 = por %p58, %p59
      %p62 = scmp.ne.s32.totalorder %s45, %s61
      %p63 = scmp.eq.s32.totalorder %s16, 0
      %p64 = por %p62, %p63
      %s65 = ssub.s32 %s17, %s36
      %s66 = ssub.s32 %s19, %s28
      %s67 = sor.u32 %s65, %s66
      %p68 = scmp.eq.s32.totalorder %s67, 0
      %s70 = sadd.s32 %s69, 1
      %s71 = scalar_select %p68, %s69, %s70
      %p74 = pneg %p68
      %p75 = scmp.eq.s32.totalorder %s10, 15
      %p76 = por %p74, %p75
      %p77 = scmp.ne.s32.totalorder %s69, %s72
      %p78 = scmp.eq.s32.totalorder %s10, 0
      %p79 = por %p77, %p78
      %p80 = scmp.ne.s32.totalorder %s69, %s72
      %p81 = scmp.eq.s32.totalorder %s15, 15
      %p82 = por %p80, %p81
      %p83 = scmp.ne.s32.totalorder %s72, %s73
      %p84 = scmp.eq.s32.totalorder %s15, 0
      %p85 = por %p83, %p84
      %p86 = scmp.ne.s32.totalorder %s72, %s73
      %p87 = scmp.eq.s32.totalorder %s16, 15
      %p88 = por %p86, %p87
      %p90 = scmp.ne.s32.totalorder %s73, %s89
      %p91 = scmp.eq.s32.totalorder %s16, 0
      %p92 = por %p90, %p91
      %s93 = ssub.s32 %s17, %s36
      %s94 = ssub.s32 %s19, %s28
      %s95 = sor.u32 %s93, %s94
      %p96 = scmp.eq.s32.totalorder %s95, 0
      %s98 = sadd.s32 %s97, 1
      %s99 = scalar_select %p96, %s97, %s98
      %p102 = pneg %p96
      %p103 = scmp.eq.s32.totalorder %s10, 15
      %p104 = por %p102, %p103
      %p105 = scmp.ne.s32.totalorder %s97, %s100
      %p106 = scmp.eq.s32.totalorder %s10, 0
      %p107 = por %p105, %p106
      %p108 = scmp.ne.s32.totalorder %s97, %s100
      %p109 = scmp.eq.s32.totalorder %s15, 15
      %p110 = por %p108, %p109
      %p111 = scmp.ne.s32.totalorder %s100, %s101
      %p112 = scmp.eq.s32.totalorder %s15, 0
      %p113 = por %p111, %p112
      %p114 = scmp.ne.s32.totalorder %s100, %s101
      %p115 = scmp.eq.s32.totalorder %s16, 15
      %p116 = por %p114, %p115
      %p118 = scmp.ne.s32.totalorder %s101, %s117
      %p119 = scmp.eq.s32.totalorder %s16, 0
      %p120 = por %p118, %p119
      %s121 = ssub.s32 %s18, %s32
      %p122 = scmp.eq.s32.totalorder %s121, 0
      %s124 = sadd.s32 %s123, 1
      %s125 = scalar_select %p122, %s123, %s124
      %p128 = pneg %p122
      %p129 = scmp.eq.s32.totalorder %s10, 15
      %p130 = por %p128, %p129
      %p131 = scmp.ne.s32.totalorder %s123, %s126
      %p132 = scmp.eq.s32.totalorder %s10, 0
      %p133 = por %p131, %p132
      %p134 = scmp.ne.s32.totalorder %s123, %s126
      %p135 = scmp.eq.s32.totalorder %s15, 15
      %p136 = por %p134, %p135
      %p137 = scmp.ne.s32.totalorder %s126, %s127
      %p138 = scmp.eq.s32.totalorder %s15, 0
      %p139 = por %p137, %p138
      %p140 = scmp.ne.s32.totalorder %s126, %s127
      %p141 = scmp.eq.s32.totalorder %s16, 15
      %p142 = por %p140, %p141
      %p144 = scmp.ne.s32.totalorder %s127, %s143
      %p145 = scmp.eq.s32.totalorder %s16, 0
      %p146 = por %p144, %p145
      %s147 = ssub.s32 %s17, %s36
      %s148 = ssub.s32 %s18, %s32
      %s149 = sor.u32 %s147, %s148
      %p150 = scmp.eq.s32.totalorder %s149, 0
      %s152 = sadd.s32 %s151, 1
      %s153 = scalar_select %p150, %s151, %s152
      %p156 = pneg %p150
      %p157 = scmp.eq.s32.totalorder %s10, 15
      %p158 = por %p156, %p157
      %p159 = scmp.ne.s32.totalorder %s151, %s154
      %p160 = scmp.eq.s32.totalorder %s10, 0
      %p161 = por %p159, %p160
      %p162 = scmp.ne.s32.totalorder %s151, %s154
      %p163 = scmp.eq.s32.totalorder %s15, 15
      %p164 = por %p162, %p163
      %p165 = scmp.ne.s32.totalorder %s154, %s155
      %p166 = scmp.eq.s32.totalorder %s15, 0
      %p167 = por %p165, %p166
      %p168 = scmp.ne.s32.totalorder %s154, %s155
      %p169 = scmp.eq.s32.totalorder %s16, 15
      %p170 = por %p168, %p169
      %p172 = scmp.ne.s32.totalorder %s155, %s171
      %p173 = scmp.eq.s32.totalorder %s16, 0
      %p174 = por %p172, %p173
      %p175 = scmp.le.s32.totalorder 1, %s10
      %p176 = scmp.lt.s32.totalorder %s10, 17
      %p177 = pnand %p175, %p176
      %p178 = pneg %p177
      // Predicated region
      $region9: #{spin_forward.1} parent=5 // pred_check
        _
      $region10: #{spin_forward.1} parent=5 // pred_check_branch
        %180 = sbr.rel (%p177) target = $region12
      $region11: #{spin_forward.1} parent=5 // pred_region
        %s181 = ssub.s32 %s10, 1
      $region12: #{spin_forward.1} parent=5 // pred_fallthru
        _
      %p182 = scmp.lt.s32.totalorder %s10, 16
      // Predicated region
      $region13: #{spin_forward.1} parent=5 // pred_check
        %p183 = pneg %p182
      $region14: #{spin_forward.1} parent=5 // pred_check_branch
        %185 = sbr.rel (%p183) target = $region16
      $region15: #{spin_forward.1} parent=5 // pred_region
        // Predicated region
        $region17: #{spin_forward.1} parent=15 // pred_check
          %p186 = pneg %p51
        $region18: #{spin_forward.1} parent=15 // pred_check_branch
          %188 = sbr.rel (%p186) target = $region20
        $region19: #{spin_forward.1} parent=15 // pred_region
          %s189 = sand.u32 %s41, 1
          %s190 = sand.u32 %s41, 1
          %s191 = smul.addr %s190, 128
          %s192 = scalar_lea.vmem [#allocation5], %s191
          %s193 = smul.u32 2, %s18
          %s194 = smul.addr %s17, 64
          %s195 = sadd.s32 %s193, %s194
          %s196 = smul.addr %s195, 4
          %s197 = scalar_lea.vmem %s0, %s196
          // Predicated region
          $region21: #{spin_forward.1} parent=19 // pred_check
            _
          $region22: #{spin_forward.1} parent=19 // pred_check_branch
            %199 = sbr.rel (0) target = $region24
          $region23: #{spin_forward.1} parent=19 // pred_region
            // Predicated region
            $region25: #{spin_forward.1} parent=23 // pred_check
              _
            $region26: #{spin_forward.1} parent=23 // pred_check_branch
              %201 = sbr.rel (0) target = $region28
            $region27: #{spin_forward.1} parent=23 // pred_region
              // Predicated region
              $region40: #{spin_forward.1} parent=27 // pred_check
                _
              $region41: #{spin_forward.1} parent=27 // pred_check_branch
                %246 = sbr.rel (0) target = $region43
              $region42: #{spin_forward.1} parent=27 // pred_region
                loop: start=0, step=1, limit=1
                $region44: #{spin_forward.1} parent=42 // loop_pre_header
                  _
                $region45: #{spin_forward.1} parent=42 // loop_header
                  %s248 = sphi 0, %s252
                  %p249 = scmp.ge.s32.totalorder %s248, 1
                  %s253 = sphi %s197, %s197
                  %s254 = sphi %s192, %s192
                $region46: #{spin_forward.1} parent=42 // loop_header_branch
                  %251 = sbr.rel (%p249) target = $region50
                $region47: #{spin_forward.1} parent=42 // loop_body
                  %v255 = vld [vmem:[%s253] sm:$0xff]
                  %256 = vst [vmem:[%s254] sm:$0xff] %v255
                  %v257 = vld [vmem:[%s253 + $0x10] sm:$0xff]
                  %258 = vst [vmem:[%s254 + $0x8] sm:$0xff] %v257
                  %v259 = vld [vmem:[%s253 + $0x20] sm:$0xff]
                  %260 = vst [vmem:[%s254 + $0x10] sm:$0xff] %v259
                  %v261 = vld [vmem:[%s253 + $0x30] sm:$0xff]
                  %262 = vst [vmem:[%s254 + $0x18] sm:$0xff] %v261
                  %v263 = vld [vmem:[%s253 + $0x40] sm:$0xff]
                  %264 = vst [vmem:[%s254 + $0x20] sm:$0xff] %v263
                  %v265 = vld [vmem:[%s253 + $0x50] sm:$0xff]
                  %266 = vst [vmem:[%s254 + $0x28] sm:$0xff] %v265
                  %v267 = vld [vmem:[%s253 + $0x60] sm:$0xff]
                  %268 = vst [vmem:[%s254 + $0x30] sm:$0xff] %v267
                  %v269 = vld [vmem:[%s253 + $0x70] sm:$0xff]
                  %270 = vst [vmem:[%s254 + $0x38] sm:$0xff] %v269
                  %v271 = vld [vmem:[%s253 + $0x80] sm:$0xff]
                  %272 = vst [vmem:[%s254 + $0x40] sm:$0xff] %v271
                  %v273 = vld [vmem:[%s253 + $0x90] sm:$0xff]
                  %274 = vst [vmem:[%s254 + $0x48] sm:$0xff] %v273
                  %v275 = vld [vmem:[%s253 + $0xa0] sm:$0xff]
                  %276 = vst [vmem:[%s254 + $0x50] sm:$0xff] %v275
                  %v277 = vld [vmem:[%s253 + $0xb0] sm:$0xff]
                  %278 = vst [vmem:[%s254 + $0x58] sm:$0xff] %v277
                  %v279 = vld [vmem:[%s253 + $0xc0] sm:$0xff]
                  %280 = vst [vmem:[%s254 + $0x60] sm:$0xff] %v279
                  %v281 = vld [vmem:[%s253 + $0xd0] sm:$0xff]
                  %282 = vst [vmem:[%s254 + $0x68] sm:$0xff] %v281
                  %v283 = vld [vmem:[%s253 + $0xe0] sm:$0xff]
                  %284 = vst [vmem:[%s254 + $0x70] sm:$0xff] %v283
                  %v285 = vld [vmem:[%s253 + $0xf0] sm:$0xff]
                  %286 = vst [vmem:[%s254 + $0x78] sm:$0xff] %v285
                $region48: #{spin_forward.1} parent=42 // loop_footer
                  %s252 = sadd.s32 1, %s248
                $region49: #{spin_forward.1} parent=42 // loop_footer_branch
                  %247 = sbr.rel target = $region45
                $region50: #{spin_forward.1} parent=42 // loop_exit
                  _
              $region43: #{spin_forward.1} parent=27 // pred_fallthru
                _
              // Predicated region
              $region51: #{spin_forward.1} parent=27 // pred_check
                _
              $region52: #{spin_forward.1} parent=27 // pred_check_branch
                %288 = sbr.rel target = $region54
              $region53: #{spin_forward.1} parent=27 // pred_region
                _
              $region54: #{spin_forward.1} parent=27 // pred_fallthru
                _
            $region28: #{spin_forward.1} parent=23 // pred_fallthru
              _
            // Predicated region
            $region29: #{spin_forward.1} parent=23 // pred_check
              _
            $region30: #{spin_forward.1} parent=23 // pred_check_branch
              %203 = sbr.rel target = $region32
            $region31: #{spin_forward.1} parent=23 // pred_region
              loop: start=0, step=1, limit=1
              $region33: #{spin_forward.1} parent=31 // loop_pre_header
                _
              $region34: #{spin_forward.1} parent=31 // loop_header
                %s206 = sphi 0, %s210
                %p207 = scmp.ge.s32.totalorder %s206, 1
                %s211 = sphi %s197, %s197
                %s212 = sphi %s192, %s192
              $region35: #{spin_forward.1} parent=31 // loop_header_branch
                %209 = sbr.rel (%p207) target = $region39
              $region36: #{spin_forward.1} parent=31 // loop_body
                %v213 = vld [vmem:[%s211] sm:$0xff]
                %214 = vst [vmem:[%s212] sm:$0xff] %v213
                %v215 = vld [vmem:[%s211 + $0x10] sm:$0xff]
                %216 = vst [vmem:[%s212 + $0x8] sm:$0xff] %v215
                %v217 = vld [vmem:[%s211 + $0x20] sm:$0xff]
                %218 = vst [vmem:[%s212 + $0x10] sm:$0xff] %v217
                %v219 = vld [vmem:[%s211 + $0x30] sm:$0xff]
                %220 = vst [vmem:[%s212 + $0x18] sm:$0xff] %v219
                %v221 = vld [vmem:[%s211 + $0x40] sm:$0xff]
                %222 = vst [vmem:[%s212 + $0x20] sm:$0xff] %v221
                %v223 = vld [vmem:[%s211 + $0x50] sm:$0xff]
                %224 = vst [vmem:[%s212 + $0x28] sm:$0xff] %v223
                %v225 = vld [vmem:[%s211 + $0x60] sm:$0xff]
                %226 = vst [vmem:[%s212 + $0x30] sm:$0xff] %v225
                %v227 = vld [vmem:[%s211 + $0x70] sm:$0xff]
                %228 = vst [vmem:[%s212 + $0x38] sm:$0xff] %v227
                %v229 = vld [vmem:[%s211 + $0x80] sm:$0xff]
                %230 = vst [vmem:[%s212 + $0x40] sm:$0xff] %v229
                %v231 = vld [vmem:[%s211 + $0x90] sm:$0xff]
                %232 = vst [vmem:[%s212 + $0x48] sm:$0xff] %v231
                %v233 = vld [vmem:[%s211 + $0xa0] sm:$0xff]
                %234 = vst [vmem:[%s212 + $0x50] sm:$0xff] %v233
                %v235 = vld [vmem:[%s211 + $0xb0] sm:$0xff]
                %236 = vst [vmem:[%s212 + $0x58] sm:$0xff] %v235
                %v237 = vld [vmem:[%s211 + $0xc0] sm:$0xff]
                %238 = vst [vmem:[%s212 + $0x60] sm:$0xff] %v237
                %v239 = vld [vmem:[%s211 + $0xd0] sm:$0xff]
                %240 = vst [vmem:[%s212 + $0x68] sm:$0xff] %v239
                %v241 = vld [vmem:[%s211 + $0xe0] sm:$0xff]
                %242 = vst [vmem:[%s212 + $0x70] sm:$0xff] %v241
                %v243 = vld [vmem:[%s211 + $0xf0] sm:$0xff]
                %244 = vst [vmem:[%s212 + $0x78] sm:$0xff] %v243
              $region37: #{spin_forward.1} parent=31 // loop_footer
                %s210 = sadd.s32 1, %s206
              $region38: #{spin_forward.1} parent=31 // loop_footer_branch
                %205 = sbr.rel target = $region34
              $region39: #{spin_forward.1} parent=31 // loop_exit
                _
            $region32: #{spin_forward.1} parent=23 // pred_fallthru
              _
          $region24: #{spin_forward.1} parent=19 // pred_fallthru
            _
          %289 = vnop
        $region20: #{spin_forward.1} parent=15 // pred_fallthru
          _
        // Predicated region
        $region55: #{spin_forward.1} parent=15 // pred_check
          %p290 = pneg %p79
        $region56: #{spin_forward.1} parent=15 // pred_check_branch
          %292 = sbr.rel (%p290) target = $region58
        $region57: #{spin_forward.1} parent=15 // pred_region
          %s293 = smul.u32 32, %s19
          %p294 = scmp.lt.s32.totalorder %s17, 1
          %s295 = scalar_select %p294, %s17, 1
          %p296 = scmp.lt.s32.totalorder %s293, 127
          %s297 = scalar_select %p296, %s293, 127
          %s298 = smul.addr %s295, 128
          %s299 = sadd.s32 %s297, %s298
          %s300 = smul.addr %s299, 4
          %s301 = scalar_lea.vmem %s1, %s300
          %s302 = smul.u32 32, %s19
        $region58: #{spin_forward.1} parent=15 // pred_fallthru
          _
        // Predicated region
        $region59: #{spin_forward.1} parent=15 // pred_check
          %p303 = pneg %p107
        $region60: #{spin_forward.1} parent=15 // pred_check_branch
          %305 = sbr.rel (%p303) target = $region62
        $region61: #{spin_forward.1} parent=15 // pred_region
          %s306 = smul.u32 32, %s19
          %p307 = scmp.lt.s32.totalorder %s17, 1
          %s308 = scalar_select %p307, %s17, 1
          %p309 = scmp.lt.s32.totalorder %s306, 127
          %s310 = scalar_select %p309, %s306, 127
          %s311 = smul.addr %s308, 128
          %s312 = sadd.s32 %s310, %s311
          %s313 = smul.addr %s312, 8
          %s314 = scalar_lea.vmem %s2, %s313
          %s315 = smul.u32 32, %s19
        $region62: #{spin_forward.1} parent=15 // pred_fallthru
          _
        // Predicated region
        $region63: #{spin_forward.1} parent=15 // pred_check
          %p316 = pneg %p133
        $region64: #{spin_forward.1} parent=15 // pred_check_branch
          %318 = sbr.rel (%p316) target = $region66
        $region65: #{spin_forward.1} parent=15 // pred_region
          %s319 = smul.u32 2, %s18
          %p320 = scmp.lt.s32.totalorder %s319, 3
          %s321 = scalar_select %p320, %s319, 3
          %s322 = scalar_lea.vmem %s3, %s321
          %s323 = smul.u32 2, %s18
        $region66: #{spin_forward.1} parent=15 // pred_fallthru
          _
      $region16: #{spin_forward.1} parent=5 // pred_fallthru
        _
      %p324 = scmp.le.s32.totalorder 1, %s10
      %p325 = scmp.lt.s32.totalorder %s10, 17
      %p326 = pnand %p324, %p325
      %p327 = pneg %p326
      // Predicated region
      $region67: #{spin_forward.1} parent=5 // pred_check
        _
      $region68: #{spin_forward.1} parent=5 // pred_check_branch
        %329 = sbr.rel (%p326) target = $region70
      $region69: #{spin_forward.1} parent=5 // pred_region
        %s330 = ssub.s32 %s10, 1
        %s331 = sand.u32 %s44, 1
        %s332 = sand.u32 %s44, 1
        %s333 = smul.addr %s332, 128
        %s334 = scalar_lea.vmem [#allocation5], %s333
        // Predicated region
        $region71: #{spin_forward.1} parent=69 // pred_check
          %p335 = pneg %p57
        $region72: #{spin_forward.1} parent=69 // pred_check_branch
          %337 = sbr.rel (%p335) target = $region74
        $region73: #{spin_forward.1} parent=69 // pred_region
          _
        $region74: #{spin_forward.1} parent=69 // pred_fallthru
          _
        %s338 = sand.u32 %s44, 1
        %s339 = sand.u32 %s44, 1
        %s340 = smul.addr %s339, 128
        %s341 = scalar_lea.vmem [#allocation5], %s340
        %p342 = pneg %p57
        %p343 = pneg %p54
        %s344 = smul.u32 32, %s22
        %p345 = scmp.lt.s32.totalorder %s20, 1
        %s346 = scalar_select %p345, %s20, 1
        %p347 = scmp.lt.s32.totalorder %s344, 127
        %s348 = scalar_select %p347, %s344, 127
        %s349 = smul.addr %s346, 128
        %s350 = sadd.s32 %s348, %s349
        %s351 = smul.addr %s350, 4
        %s352 = scalar_lea.vmem %s1, %s351
        %p353 = pneg %p85
        %p354 = pneg %p82
        %s355 = smul.u32 32, %s22
        %p356 = scmp.lt.s32.totalorder %s20, 1
        %s357 = scalar_select %p356, %s20, 1
        %p358 = scmp.lt.s32.totalorder %s355, 127
        %s359 = scalar_select %p358, %s355, 127
        %s360 = smul.addr %s357, 128
        %s361 = sadd.s32 %s359, %s360
        %s362 = smul.addr %s361, 8
        %s363 = scalar_lea.vmem %s2, %s362
        %p364 = pneg %p113
        %p365 = pneg %p110
        %s366 = smul.u32 2, %s21
        %p367 = scmp.lt.s32.totalorder %s366, 3
        %s368 = scalar_select %p367, %s366, 3
        %s369 = scalar_lea.vmem %s3, %s368
        %p370 = pneg %p139
        %p371 = pneg %p136
        %p372 = pneg %p167
        %p373 = pneg %p164
        %p374 = scmp.lt.s32.totalorder %s20, 1
        %s375 = scalar_select %p374, %s20, 1
        %p376 = scmp.lt.s32.totalorder %s21, 1
        %s377 = scalar_select %p376, %s21, 1
        %s378 = smul.addr %s377, 2
        %s379 = smul.addr %s375, 4
        %s380 = sadd.s32 %s378, %s379
        %s381 = smul.addr %s380, 8
        %s382 = scalar_lea.vmem %s4, %s381
        %s383 = smul.u32 2, %s21
        %s384 = smul.u32 32, %s22
        %p385 = scmp.lt.s32.totalorder %s20, 1
        %s386 = scalar_select %p385, %s20, 1
        %p387 = scmp.lt.s32.totalorder %s384, 127
        %s388 = scalar_select %p387, %s384, 127
        %s389 = smul.addr %s386, 128
        %s390 = sadd.s32 %s388, %s389
        %s391 = smul.addr %s390, 4
        %s392 = scalar_lea.vmem %s1, %s391
        %s393 = smul.u32 32, %s22
        %s394 = smul.u32 32, %s22
        %p395 = scmp.lt.s32.totalorder %s20, 1
        %s396 = scalar_select %p395, %s20, 1
        %p397 = scmp.lt.s32.totalorder %s394, 127
        %s398 = scalar_select %p397, %s394, 127
        %s399 = smul.addr %s396, 128
        %s400 = sadd.s32 %s398, %s399
        %s401 = smul.addr %s400, 8
        %s402 = scalar_lea.vmem %s2, %s401
        %s403 = smul.u32 32, %s22
        %s404 = smul.u32 2, %s21
        %p405 = scmp.lt.s32.totalorder %s404, 3
        %s406 = scalar_select %p405, %s404, 3
        %s407 = scalar_lea.vmem %s3, %s406
        %s408 = smul.u32 2, %s21
        %p409 = scmp.lt.s32.totalorder %s20, 1
        %s410 = scalar_select %p409, %s20, 1
        %p411 = scmp.lt.s32.totalorder %s21, 1
        %s412 = scalar_select %p411, %s21, 1
        %s413 = smul.addr %s412, 2
        %s414 = smul.addr %s410, 4
        %s415 = sadd.s32 %s413, %s414
        %s416 = smul.addr %s415, 8
        %s417 = scalar_lea.vmem %s4, %s416
        %p419 = scmp.eq.s32.totalorder %s22, 0
        // Predicated region
        $region75: #{spin_forward.1} parent=69 // pred_check
          %p420 = pneg %p419
        $region76: #{spin_forward.1} parent=69 // pred_check_branch
          %422 = sbr.rel (%p420) target = $region78
        $region77: #{spin_forward.1} parent=69 // pred_region
          %v423 = vlaneseq
          %vm424 = vcmp.ge.s32.totalorder %v423, 0
          %vm425 = vcmp.lt.s32.totalorder %v423, 256
          %vm426 = vmand %vm424, %vm425
          %427 = vst.msk [vmem:[#allocation2] sm:$0x3] %vm426, -1e+30
          %428 = vst.msk [vmem:[#allocation3] sm:$0x3] %vm426, 0.0
          %429 = vst.msk [vmem:[#allocation4] sm:$0x3] %vm426, 0.0
        $region78: #{spin_forward.1} parent=69 // pred_fallthru
          _
        %v430 = vld [vmem:[%s392] sm:$0xf]
        %v431 = vld [vmem:[%s392 + $0x4] sm:$0xf]
        %v432 = vld [vmem:[%s392 + $0x8] sm:$0xf]
        %v433 = vld [vmem:[%s392 + $0xc] sm:$0xf]
        %v434 = vld [vmem:[%s392 + $0x10] sm:$0xf]
        %v435 = vld [vmem:[%s392 + $0x14] sm:$0xf]
        %v436 = vld [vmem:[%s392 + $0x18] sm:$0xf]
        %v437 = vld [vmem:[%s392 + $0x1c] sm:$0xf]
        %v438 = vld [vmem:[%s392 + $0x20] sm:$0xf]
        %v439 = vld [vmem:[%s392 + $0x24] sm:$0xf]
        %v440 = vld [vmem:[%s392 + $0x28] sm:$0xf]
        %v441 = vld [vmem:[%s392 + $0x2c] sm:$0xf]
        %v442 = vld [vmem:[%s392 + $0x30] sm:$0xf]
        %v443 = vld [vmem:[%s392 + $0x34] sm:$0xf]
        %v444 = vld [vmem:[%s392 + $0x38] sm:$0xf]
        %v445 = vld [vmem:[%s392 + $0x3c] sm:$0xf]
        %v446 = vld [vmem:[%s392 + $0x40] sm:$0xf]
        %v447 = vld [vmem:[%s392 + $0x44] sm:$0xf]
        %v448 = vld [vmem:[%s392 + $0x48] sm:$0xf]
        %v449 = vld [vmem:[%s392 + $0x4c] sm:$0xf]
        %v450 = vld [vmem:[%s392 + $0x50] sm:$0xf]
        %v451 = vld [vmem:[%s392 + $0x54] sm:$0xf]
        %v452 = vld [vmem:[%s392 + $0x58] sm:$0xf]
        %v453 = vld [vmem:[%s392 + $0x5c] sm:$0xf]
        %v454 = vld [vmem:[%s392 + $0x60] sm:$0xf]
        %v455 = vld [vmem:[%s392 + $0x64] sm:$0xf]
        %v456 = vld [vmem:[%s392 + $0x68] sm:$0xf]
        %v457 = vld [vmem:[%s392 + $0x6c] sm:$0xf]
        %v458 = vld [vmem:[%s392 + $0x70] sm:$0xf]
        %v459 = vld [vmem:[%s392 + $0x74] sm:$0xf]
        %v460 = vld [vmem:[%s392 + $0x78] sm:$0xf]
        %v461 = vld [vmem:[%s392 + $0x7c] sm:$0xf]
        %v462 = vld [vmem:[%s334] sm:$0xff]
        %v463 = vld [vmem:[%s334 + $0x8] sm:$0xff]
        %v464 = vld [vmem:[%s334 + $0x10] sm:$0xff]
        %v465 = vld [vmem:[%s334 + $0x18] sm:$0xff]
        %v466 = vld [vmem:[%s334 + $0x20] sm:$0xff]
        %v467 = vld [vmem:[%s334 + $0x28] sm:$0xff]
        %v468 = vld [vmem:[%s334 + $0x30] sm:$0xff]
        %v469 = vld [vmem:[%s334 + $0x38] sm:$0xff]
        %v470 = vld [vmem:[%s334 + $0x40] sm:$0xff]
        %v471 = vld [vmem:[%s334 + $0x48] sm:$0xff]
        %v472 = vld [vmem:[%s334 + $0x50] sm:$0xff]
        %v473 = vld [vmem:[%s334 + $0x58] sm:$0xff]
        %v474 = vld [vmem:[%s334 + $0x60] sm:$0xff]
        %v475 = vld [vmem:[%s334 + $0x68] sm:$0xff]
        %v476 = vld [vmem:[%s334 + $0x70] sm:$0xff]
        %v477 = vld [vmem:[%s334 + $0x78] sm:$0xff]
        %v478 = vld [vmem:[%s402] sm:$0xff]
        %v479 = vld [vmem:[%s402 + $0x8] sm:$0xff]
        %v480 = vld [vmem:[%s402 + $0x10] sm:$0xff]
        %v481 = vld [vmem:[%s402 + $0x18] sm:$0xff]
        %v482 = vld [vmem:[%s402 + $0x20] sm:$0xff]
        %v483 = vld [vmem:[%s402 + $0x28] sm:$0xff]
        %v484 = vld [vmem:[%s402 + $0x30] sm:$0xff]
        %v485 = vld [vmem:[%s402 + $0x38] sm:$0xff]
        %v486 = vld [vmem:[%s402 + $0x40] sm:$0xff]
        %v487 = vld [vmem:[%s402 + $0x48] sm:$0xff]
        %v488 = vld [vmem:[%s402 + $0x50] sm:$0xff]
        %v489 = vld [vmem:[%s402 + $0x58] sm:$0xff]
        %v490 = vld [vmem:[%s402 + $0x60] sm:$0xff]
        %v491 = vld [vmem:[%s402 + $0x68] sm:$0xff]
        %v492 = vld [vmem:[%s402 + $0x70] sm:$0xff]
        %v493 = vld [vmem:[%s402 + $0x78] sm:$0xff]
        %v494 = vld [vmem:[%s402 + $0x80] sm:$0xff]
        %v495 = vld [vmem:[%s402 + $0x88] sm:$0xff]
        %v496 = vld [vmem:[%s402 + $0x90] sm:$0xff]
        %v497 = vld [vmem:[%s402 + $0x98] sm:$0xff]
        %v498 = vld [vmem:[%s402 + $0xa0] sm:$0xff]
        %v499 = vld [vmem:[%s402 + $0xa8] sm:$0xff]
        %v500 = vld [vmem:[%s402 + $0xb0] sm:$0xff]
        %v501 = vld [vmem:[%s402 + $0xb8] sm:$0xff]
        %v502 = vld [vmem:[%s402 + $0xc0] sm:$0xff]
        %v503 = vld [vmem:[%s402 + $0xc8] sm:$0xff]
        %v504 = vld [vmem:[%s402 + $0xd0] sm:$0xff]
        %v505 = vld [vmem:[%s402 + $0xd8] sm:$0xff]
        %v506 = vld [vmem:[%s402 + $0xe0] sm:$0xff]
        %v507 = vld [vmem:[%s402 + $0xe8] sm:$0xff]
        %v508 = vld [vmem:[%s402 + $0xf0] sm:$0xff]
        %v509 = vld [vmem:[%s402 + $0xf8] sm:$0xff]
        %511 = vset.pattern.permute.xlu0 0
        %512 = vperm.xlu0 %511, %v478
        %v513 = vpop.permute.xlu0 %512
        %516 = vset.pattern.permute.xlu0 0
        %517 = vperm.xlu0 %516, %v479
        %v518 = vpop.permute.xlu0 %517
        %521 = vset.pattern.permute.xlu0 0
        %522 = vperm.xlu0 %521, %v480
        %v523 = vpop.permute.xlu0 %522
        %526 = vset.pattern.permute.xlu0 0
        %527 = vperm.xlu0 %526, %v481
        %v528 = vpop.permute.xlu0 %527
        %531 = vset.pattern.permute.xlu0 0
        %532 = vperm.xlu0 %531, %v482
        %v533 = vpop.permute.xlu0 %532
        %536 = vset.pattern.permute.xlu0 0
        %537 = vperm.xlu0 %536, %v483
        %v538 = vpop.permute.xlu0 %537
        %541 = vset.pattern.permute.xlu0 0
        %542 = vperm.xlu0 %541, %v484
        %v543 = vpop.permute.xlu0 %542
        %546 = vset.pattern.permute.xlu0 0
        %547 = vperm.xlu0 %546, %v485
        %v548 = vpop.permute.xlu0 %547
        %551 = vset.pattern.permute.xlu0 0
        %552 = vperm.xlu0 %551, %v486
        %v553 = vpop.permute.xlu0 %552
        %556 = vset.pattern.permute.xlu0 0
        %557 = vperm.xlu0 %556, %v487
        %v558 = vpop.permute.xlu0 %557
        %561 = vset.pattern.permute.xlu0 0
        %562 = vperm.xlu0 %561, %v488
        %v563 = vpop.permute.xlu0 %562
        %566 = vset.pattern.permute.xlu0 0
        %567 = vperm.xlu0 %566, %v489
        %v568 = vpop.permute.xlu0 %567
        %571 = vset.pattern.permute.xlu0 0
        %572 = vperm.xlu0 %571, %v490
        %v573 = vpop.permute.xlu0 %572
        %576 = vset.pattern.permute.xlu0 0
        %577 = vperm.xlu0 %576, %v491
        %v578 = vpop.permute.xlu0 %577
        %581 = vset.pattern.permute.xlu0 0
        %582 = vperm.xlu0 %581, %v492
        %v583 = vpop.permute.xlu0 %582
        %586 = vset.pattern.permute.xlu0 0
        %587 = vperm.xlu0 %586, %v493
        %v588 = vpop.permute.xlu0 %587
        %591 = vset.pattern.permute.xlu0 0
        %592 = vperm.xlu0 %591, %v494
        %v593 = vpop.permute.xlu0 %592
        %596 = vset.pattern.permute.xlu0 0
        %597 = vperm.xlu0 %596, %v495
        %v598 = vpop.permute.xlu0 %597
        %601 = vset.pattern.permute.xlu0 0
        %602 = vperm.xlu0 %601, %v496
        %v603 = vpop.permute.xlu0 %602
        %606 = vset.pattern.permute.xlu0 0
        %607 = vperm.xlu0 %606, %v497
        %v608 = vpop.permute.xlu0 %607
        %611 = vset.pattern.permute.xlu0 0
        %612 = vperm.xlu0 %611, %v498
        %v613 = vpop.permute.xlu0 %612
        %616 = vset.pattern.permute.xlu0 0
        %617 = vperm.xlu0 %616, %v499
        %v618 = vpop.permute.xlu0 %617
        %621 = vset.pattern.permute.xlu0 0
        %622 = vperm.xlu0 %621, %v500
        %v623 = vpop.permute.xlu0 %622
        %626 = vset.pattern.permute.xlu0 0
        %627 = vperm.xlu0 %626, %v501
        %v628 = vpop.permute.xlu0 %627
        %631 = vset.pattern.permute.xlu0 0
        %632 = vperm.xlu0 %631, %v502
        %v633 = vpop.permute.xlu0 %632
        %636 = vset.pattern.permute.xlu0 0
        %637 = vperm.xlu0 %636, %v503
        %v638 = vpop.permute.xlu0 %637
        %641 = vset.pattern.permute.xlu0 0
        %642 = vperm.xlu0 %641, %v504
        %v643 = vpop.permute.xlu0 %642
        %646 = vset.pattern.permute.xlu0 0
        %647 = vperm.xlu0 %646, %v505
        %v648 = vpop.permute.xlu0 %647
        %651 = vset.pattern.permute.xlu0 0
        %652 = vperm.xlu0 %651, %v506
        %v653 = vpop.permute.xlu0 %652
        %656 = vset.pattern.permute.xlu0 0
        %657 = vperm.xlu0 %656, %v507
        %v658 = vpop.permute.xlu0 %657
        %661 = vset.pattern.permute.xlu0 0
        %662 = vperm.xlu0 %661, %v508
        %v663 = vpop.permute.xlu0 %662
        %666 = vset.pattern.permute.xlu0 0
        %667 = vperm.xlu0 %666, %v509
        %v668 = vpop.permute.xlu0 %667
        %v702 = vunpack.c.l.b16 %v430
        %v703 = vunpack.c.l.b16 %v431
        %v704 = vunpack.c.l.b16 %v432
        %v705 = vunpack.c.l.b16 %v433
        %v706 = vunpack.c.l.b16 %v434
        %v707 = vunpack.c.l.b16 %v435
        %v708 = vunpack.c.l.b16 %v436
        %v709 = vunpack.c.l.b16 %v437
        %v710 = vunpack.c.l.b16 %v438
        %v711 = vunpack.c.l.b16 %v439
        %v712 = vunpack.c.l.b16 %v440
        %v713 = vunpack.c.l.b16 %v441
        %v714 = vunpack.c.l.b16 %v442
        %v715 = vunpack.c.l.b16 %v443
        %v716 = vunpack.c.l.b16 %v444
        %v717 = vunpack.c.l.b16 %v445
        %v718 = vunpack.c.l.b16 %v446
        %v719 = vunpack.c.l.b16 %v447
        %v720 = vunpack.c.l.b16 %v448
        %v721 = vunpack.c.l.b16 %v449
        %v722 = vunpack.c.l.b16 %v450
        %v723 = vunpack.c.l.b16 %v451
        %v724 = vunpack.c.l.b16 %v452
        %v725 = vunpack.c.l.b16 %v453
        %v726 = vunpack.c.l.b16 %v454
        %v727 = vunpack.c.l.b16 %v455
        %v728 = vunpack.c.l.b16 %v456
        %v729 = vunpack.c.l.b16 %v457
        %v730 = vunpack.c.l.b16 %v458
        %v731 = vunpack.c.l.b16 %v459
        %v732 = vunpack.c.l.b16 %v460
        %v733 = vunpack.c.l.b16 %v461
        %v734 = vpack.c.b16 %v703, %v702
        %v735 = vpack.c.b16 %v705, %v704
        %v736 = vpack.c.b16 %v707, %v706
        %v737 = vpack.c.b16 %v709, %v708
        %v738 = vpack.c.b16 %v711, %v710
        %v739 = vpack.c.b16 %v713, %v712
        %v740 = vpack.c.b16 %v715, %v714
        %v741 = vpack.c.b16 %v717, %v716
        %v742 = vpack.c.b16 %v719, %v718
        %v743 = vpack.c.b16 %v721, %v720
        %v744 = vpack.c.b16 %v723, %v722
        %v745 = vpack.c.b16 %v725, %v724
        %v746 = vpack.c.b16 %v727, %v726
        %v747 = vpack.c.b16 %v729, %v728
        %v748 = vpack.c.b16 %v731, %v730
        %v749 = vpack.c.b16 %v733, %v732
        %v782 = vunpack.c.l.b16 %v462
        %v783 = vunpack.c.h.b16 %v462
        %v784 = vunpack.c.l.b16 %v463
        %v785 = vunpack.c.h.b16 %v463
        %v786 = vunpack.c.l.b16 %v464
        %v787 = vunpack.c.h.b16 %v464
        %v788 = vunpack.c.l.b16 %v465
        %v789 = vunpack.c.h.b16 %v465
        %v790 = vunpack.c.l.b16 %v466
        %v791 = vunpack.c.h.b16 %v466
        %v792 = vunpack.c.l.b16 %v467
        %v793 = vunpack.c.h.b16 %v467
        %v794 = vunpack.c.l.b16 %v468
        %v795 = vunpack.c.h.b16 %v468
        %v796 = vunpack.c.l.b16 %v469
        %v797 = vunpack.c.h.b16 %v469
        %v798 = vunpack.c.l.b16 %v470
        %v799 = vunpack.c.h.b16 %v470
        %v800 = vunpack.c.l.b16 %v471
        %v801 = vunpack.c.h.b16 %v471
        %v802 = vunpack.c.l.b16 %v472
        %v803 = vunpack.c.h.b16 %v472
        %v804 = vunpack.c.l.b16 %v473
        %v805 = vunpack.c.h.b16 %v473
        %v806 = vunpack.c.l.b16 %v474
        %v807 = vunpack.c.h.b16 %v474
        %v808 = vunpack.c.l.b16 %v475
        %v809 = vunpack.c.h.b16 %v475
        %v810 = vunpack.c.l.b16 %v476
        %v811 = vunpack.c.h.b16 %v476
        %v812 = vunpack.c.l.b16 %v477
        %v813 = vunpack.c.h.b16 %v477
        %v814 = vpack.c.b16 %v784, %v782
        %v815 = vpack.c.b16 %v785, %v783
        %v816 = vpack.c.b16 %v788, %v786
        %v817 = vpack.c.b16 %v789, %v787
        %v818 = vpack.c.b16 %v792, %v790
        %v819 = vpack.c.b16 %v793, %v791
        %v820 = vpack.c.b16 %v796, %v794
        %v821 = vpack.c.b16 %v797, %v795
        %v822 = vpack.c.b16 %v800, %v798
        %v823 = vpack.c.b16 %v801, %v799
        %v824 = vpack.c.b16 %v804, %v802
        %v825 = vpack.c.b16 %v805, %v803
        %v826 = vpack.c.b16 %v808, %v806
        %v827 = vpack.c.b16 %v809, %v807
        %v828 = vpack.c.b16 %v812, %v810
        %v829 = vpack.c.b16 %v813, %v811
        %846 = vmatprep.subr.bf16.mxu0 %v815
        %847 = vmatpush1.bf16.msra.mxu0 %v814
        %848 = vmatprep.subr.bf16.mxu0 %v817
        %849 = vmatpush1.bf16.msra.mxu0 %v816
        %850 = vmatprep.subr.bf16.mxu0 %v819
        %851 = vmatpush1.bf16.msra.mxu0 %v818
        %852 = vmatprep.subr.bf16.mxu0 %v821
        %853 = vmatpush1.bf16.msra.mxu0 %v820
        %854 = vmatprep.subr.bf16.mxu0 %v823
        %855 = vmatpush1.bf16.msra.mxu0 %v822
        %856 = vmatprep.subr.bf16.mxu0 %v825
        %857 = vmatpush1.bf16.msra.mxu0 %v824
        %858 = vmatprep.subr.bf16.mxu0 %v827
        %859 = vmatpush1.bf16.msra.mxu0 %v826
        %860 = vmatprep.subr.bf16.mxu0 %v829
        %861 = vmatpush1.bf16.msra.mxu0 %v828
        %862 = vmatprep.subr.bf16.mxu0 0
        %863 = vmatpush1.bf16.msra.mxu0 0
        %864 = vmatprep.subr.bf16.mxu0 0
        %865 = vmatpush1.bf16.msra.mxu0 0
        %866 = vmatprep.subr.bf16.mxu0 0
        %867 = vmatpush1.bf16.msra.mxu0 0
        %868 = vmatprep.subr.bf16.mxu0 0
        %869 = vmatpush1.bf16.msra.mxu0 0
        %870 = vmatprep.subr.bf16.mxu0 0
        %871 = vmatpush1.bf16.msra.mxu0 0
        %872 = vmatprep.subr.bf16.mxu0 0
        %873 = vmatpush1.bf16.msra.mxu0 0
        %874 = vmatprep.subr.bf16.mxu0 0
        %875 = vmatpush1.bf16.msra.mxu0 0
        %876 = vmatprep.subr.bf16.mxu0 0
        %877 = vmatpush1.bf16.msra.mxu0 0
        %878 = vmatprep.mubr.bf16.mxu0 0
        %879 = vmatmul.mubr.bf16.gmra.mrb[0].mxu0 %v734
        %v880 = vpop.f32.mrb[0].mxu0
        %v881 = vadd.f32 %v513, %v880
        %v882 = vpop.f32.mrb[0].mxu0
        %v883 = vadd.f32 %v513, %v882
        %v884 = vpop.f32.mrb[0].mxu0
        %v885 = vadd.f32 %v518, %v884
        %v886 = vpop.f32.mrb[0].mxu0
        %v887 = vadd.f32 %v518, %v886
        %888 = vmatprep.mubr.bf16.mxu0 0
        %889 = vmatmul.mubr.bf16.gmra.mrb[0].mxu0 %v735
        %v890 = vpop.f32.mrb[0].mxu0
        %v891 = vadd.f32 %v523, %v890
        %v892 = vpop.f32.mrb[0].mxu0
        %v893 = vadd.f32 %v523, %v892
        %v894 = vpop.f32.mrb[0].mxu0
        %v895 = vadd.f32 %v528, %v894
        %v896 = vpop.f32.mrb[0].mxu0
        %v897 = vadd.f32 %v528, %v896
        %898 = vmatprep.mubr.bf16.mxu0 0
        %899 = vmatmul.mubr.bf16.gmra.mrb[0].mxu0 %v736
        %v900 = vpop.f32.mrb[0].mxu0
        %v901 = vadd.f32 %v533, %v900
        %v902 = vpop.f32.mrb[0].mxu0
        %v903 = vadd.f32 %v533, %v902
        %v904 = vpop.f32.mrb[0].mxu0
        %v905 = vadd.f32 %v538, %v904
        %v906 = vpop.f32.mrb[0].mxu0
        %v907 = vadd.f32 %v538, %v906
        %908 = vmatprep.mubr.bf16.mxu0 0
        %909 = vmatmul.mubr.bf16.gmra.mrb[0].mxu0 %v737
        %v910 = vpop.f32.mrb[0].mxu0
        %v911 = vadd.f32 %v543, %v910
        %v912 = vpop.f32.mrb[0].mxu0
        %v913 = vadd.f32 %v543, %v912
        %v914 = vpop.f32.mrb[0].mxu0
        %v915 = vadd.f32 %v548, %v914
        %v916 = vpop.f32.mrb[0].mxu0
        %v917 = vadd.f32 %v548, %v916
        %918 = vmatprep.mubr.bf16.mxu0 0
        %919 = vmatmul.mubr.bf16.gmra.mrb[0].mxu0 %v738
        %v920 = vpop.f32.mrb[0].mxu0
        %v921 = vadd.f32 %v553, %v920
        %v922 = vpop.f32.mrb[0].mxu0
        %v923 = vadd.f32 %v553, %v922
        %v924 = vpop.f32.mrb[0].mxu0
        %v925 = vadd.f32 %v558, %v924
        %v926 = vpop.f32.mrb[0].mxu0
        %v927 = vadd.f32 %v558, %v926
        %928 = vmatprep.mubr.bf16.mxu0 0
        %929 = vmatmul.mubr.bf16.gmra.mrb[0].mxu0 %v739
        %v930 = vpop.f32.mrb[0].mxu0
        %v931 = vadd.f32 %v563, %v930
        %v932 = vpop.f32.mrb[0].mxu0
        %v933 = vadd.f32 %v563, %v932
        %v934 = vpop.f32.mrb[0].mxu0
        %v935 = vadd.f32 %v568, %v934
        %v936 = vpop.f32.mrb[0].mxu0
        %v937 = vadd.f32 %v568, %v936
        %938 = vmatprep.mubr.bf16.mxu0 0
        %939 = vmatmul.mubr.bf16.gmra.mrb[0].mxu0 %v740
        %v940 = vpop.f32.mrb[0].mxu0
        %v941 = vadd.f32 %v573, %v940
        %v942 = vpop.f32.mrb[0].mxu0
        %v943 = vadd.f32 %v573, %v942
        %v944 = vpop.f32.mrb[0].mxu0
        %v945 = vadd.f32 %v578, %v944
        %v946 = vpop.f32.mrb[0].mxu0
        %v947 = vadd.f32 %v578, %v946
        %948 = vmatprep.mubr.bf16.mxu0 0
        %949 = vmatmul.mubr.bf16.gmra.mrb[0].mxu0 %v741
        %v950 = vpop.f32.mrb[0].mxu0
        %v951 = vadd.f32 %v583, %v950
        %v952 = vpop.f32.mrb[0].mxu0
        %v953 = vadd.f32 %v583, %v952
        %v954 = vpop.f32.mrb[0].mxu0
        %v955 = vadd.f32 %v588, %v954
        %v956 = vpop.f32.mrb[0].mxu0
        %v957 = vadd.f32 %v588, %v956
        %958 = vmatprep.mubr.bf16.mxu0 0
        %959 = vmatmul.mubr.bf16.gmra.mrb[0].mxu0 %v742
        %v960 = vpop.f32.mrb[0].mxu0
        %v961 = vadd.f32 %v593, %v960
        %v962 = vpop.f32.mrb[0].mxu0
        %v963 = vadd.f32 %v593, %v962
        %v964 = vpop.f32.mrb[0].mxu0
        %v965 = vadd.f32 %v598, %v964
        %v966 = vpop.f32.mrb[0].mxu0
        %v967 = vadd.f32 %v598, %v966
        %968 = vmatprep.mubr.bf16.mxu0 0
        %969 = vmatmul.mubr.bf16.gmra.mrb[0].mxu0 %v743
        %v970 = vpop.f32.mrb[0].mxu0
        %v971 = vadd.f32 %v603, %v970
        %v972 = vpop.f32.mrb[0].mxu0
        %v973 = vadd.f32 %v603, %v972
        %v974 = vpop.f32.mrb[0].mxu0
        %v975 = vadd.f32 %v608, %v974
        %v976 = vpop.f32.mrb[0].mxu0
        %v977 = vadd.f32 %v608, %v976
        %978 = vmatprep.mubr.bf16.mxu0 0
        %979 = vmatmul.mubr.bf16.gmra.mrb[0].mxu0 %v744
        %v980 = vpop.f32.mrb[0].mxu0
        %v981 = vadd.f32 %v613, %v980
        %v982 = vpop.f32.mrb[0].mxu0
        %v983 = vadd.f32 %v613, %v982
        %v984 = vpop.f32.mrb[0].mxu0
        %v985 = vadd.f32 %v618, %v984
        %v986 = vpop.f32.mrb[0].mxu0
        %v987 = vadd.f32 %v618, %v986
        %988 = vmatprep.mubr.bf16.mxu0 0
        %989 = vmatmul.mubr.bf16.gmra.mrb[0].mxu0 %v745
        %v990 = vpop.f32.mrb[0].mxu0
        %v991 = vadd.f32 %v623, %v990
        %v992 = vpop.f32.mrb[0].mxu0
        %v993 = vadd.f32 %v623, %v992
        %v994 = vpop.f32.mrb[0].mxu0
        %v995 = vadd.f32 %v628, %v994
        %v996 = vpop.f32.mrb[0].mxu0
        %v997 = vadd.f32 %v628, %v996
        %998 = vmatprep.mubr.bf16.mxu0 0
        %999 = vmatmul.mubr.bf16.gmra.mrb[0].mxu0 %v746
        %v1000 = vpop.f32.mrb[0].mxu0
        %v1001 = vadd.f32 %v633, %v1000
        %v1002 = vpop.f32.mrb[0].mxu0
        %v1003 = vadd.f32 %v633, %v1002
        %v1004 = vpop.f32.mrb[0].mxu0
        %v1005 = vadd.f32 %v638, %v1004
        %v1006 = vpop.f32.mrb[0].mxu0
        %v1007 = vadd.f32 %v638, %v1006
        %1008 = vmatprep.mubr.bf16.mxu0 0
        %1009 = vmatmul.mubr.bf16.gmra.mrb[0].mxu0 %v747
        %v1010 = vpop.f32.mrb[0].mxu0
        %v1011 = vadd.f32 %v643, %v1010
        %v1012 = vpop.f32.mrb[0].mxu0
        %v1013 = vadd.f32 %v643, %v1012
        %v1014 = vpop.f32.mrb[0].mxu0
        %v1015 = vadd.f32 %v648, %v1014
        %v1016 = vpop.f32.mrb[0].mxu0
        %v1017 = vadd.f32 %v648, %v1016
        %1018 = vmatprep.mubr.bf16.mxu0 0
        %1019 = vmatmul.mubr.bf16.gmra.mrb[0].mxu0 %v748
        %v1020 = vpop.f32.mrb[0].mxu0
        %v1021 = vadd.f32 %v653, %v1020
        %v1022 = vpop.f32.mrb[0].mxu0
        %v1023 = vadd.f32 %v653, %v1022
        %v1024 = vpop.f32.mrb[0].mxu0
        %v1025 = vadd.f32 %v658, %v1024
        %v1026 = vpop.f32.mrb[0].mxu0
        %v1027 = vadd.f32 %v658, %v1026
        %1028 = vmatprep.mubr.bf16.mxu0 0
        %1029 = vmatmul.mubr.bf16.gmra.mrb[0].mxu0 %v749
        %v1030 = vpop.f32.mrb[0].mxu0
        %v1031 = vadd.f32 %v663, %v1030
        %v1032 = vpop.f32.mrb[0].mxu0
        %v1033 = vadd.f32 %v663, %v1032
        %v1034 = vpop.f32.mrb[0].mxu0
        %v1035 = vadd.f32 %v668, %v1034
        %v1036 = vpop.f32.mrb[0].mxu0
        %v1037 = vadd.f32 %v668, %v1036
        %1038 = vdwg.mxu0
        %v1039 = vld [vmem:[%s407] sm:$0x3]
        %s1040 = smul.u32 %s22, 256
        %v1041 = vstv %s1040
        %v1042 = vsub.s32 %v1039, %v1041
        %v1043 = vlaneseq
        %v1044 = vshrl.u32 %v1043, 7
        %v1045 = vadd.s32 %v1044, 8
        %v1046 = vadd.s32 %v1044, 16
        %v1047 = vadd.s32 %v1044, 24
        %v1048 = vadd.s32 %v1044, 32
        %v1049 = vadd.s32 %v1044, 40
        %v1050 = vadd.s32 %v1044, 48
        %v1051 = vadd.s32 %v1044, 56
        %v1052 = vadd.s32 %v1044, 64
        %v1053 = vadd.s32 %v1044, 72
        %v1054 = vadd.s32 %v1044, 80
        %v1055 = vadd.s32 %v1044, 88
        %v1056 = vadd.s32 %v1044, 96
        %v1057 = vadd.s32 %v1044, 104
        %v1058 = vadd.s32 %v1044, 112
        %v1059 = vadd.s32 %v1044, 120
        %v1060 = vadd.s32 %v1044, 128
        %v1061 = vadd.s32 %v1044, 136
        %v1062 = vadd.s32 %v1044, 144
        %v1063 = vadd.s32 %v1044, 152
        %v1064 = vadd.s32 %v1044, 160
        %v1065 = vadd.s32 %v1044, 168
        %v1066 = vadd.s32 %v1044, 176
        %v1067 = vadd.s32 %v1044, 184
        %v1068 = vadd.s32 %v1044, 192
        %v1069 = vadd.s32 %v1044, 200
        %v1070 = vadd.s32 %v1044, 208
        %v1071 = vadd.s32 %v1044, 216
        %v1072 = vadd.s32 %v1044, 224
        %v1073 = vadd.s32 %v1044, 232
        %v1074 = vadd.s32 %v1044, 240
        %v1075 = vadd.s32 %v1044, 248
        %v1076 = vld [vmem:[#allocation4] sm:$0x3]
        %v1077 = vlaneseq
        %v1078 = vshrl.u32 %v1077, 7
        %v1079 = vsub.s32 0, %v1078
        %v1080 = vrot.slane %v1042, %v1079
        %v1081 = vlaneseq
        %v1082 = vshrl.u32 %v1081, 7
        %v1083 = vsub.s32 1, %v1082
        %v1084 = vrot.slane %v1042, %v1083
        %vm1085 = vcmp.eq.s32.totalorder %v1044, %v1080
        %vm1086 = vcmp.eq.s32.totalorder %v1044, %v1084
        %vm1087 = vcmp.eq.s32.totalorder %v1045, %v1080
        %vm1088 = vcmp.eq.s32.totalorder %v1045, %v1084
        %vm1089 = vcmp.eq.s32.totalorder %v1046, %v1080
        %vm1090 = vcmp.eq.s32.totalorder %v1046, %v1084
        %vm1091 = vcmp.eq.s32.totalorder %v1047, %v1080
        %vm1092 = vcmp.eq.s32.totalorder %v1047, %v1084
        %vm1093 = vcmp.eq.s32.totalorder %v1048, %v1080
        %vm1094 = vcmp.eq.s32.totalorder %v1048, %v1084
        %vm1095 = vcmp.eq.s32.totalorder %v1049, %v1080
        %vm1096 = vcmp.eq.s32.totalorder %v1049, %v1084
        %vm1097 = vcmp.eq.s32.totalorder %v1050, %v1080
        %vm1098 = vcmp.eq.s32.totalorder %v1050, %v1084
        %vm1099 = vcmp.eq.s32.totalorder %v1051, %v1080
        %vm1100 = vcmp.eq.s32.totalorder %v1051, %v1084
        %vm1101 = vcmp.eq.s32.totalorder %v1052, %v1080
        %vm1102 = vcmp.eq.s32.totalorder %v1052, %v1084
        %vm1103 = vcmp.eq.s32.totalorder %v1053, %v1080
        %vm1104 = vcmp.eq.s32.totalorder %v1053, %v1084
        %vm1105 = vcmp.eq.s32.totalorder %v1054, %v1080
        %vm1106 = vcmp.eq.s32.totalorder %v1054, %v1084
        %vm1107 = vcmp.eq.s32.totalorder %v1055, %v1080
        %vm1108 = vcmp.eq.s32.totalorder %v1055, %v1084
        %vm1109 = vcmp.eq.s32.totalorder %v1056, %v1080
        %vm1110 = vcmp.eq.s32.totalorder %v1056, %v1084
        %vm1111 = vcmp.eq.s32.totalorder %v1057, %v1080
        %vm1112 = vcmp.eq.s32.totalorder %v1057, %v1084
        %vm1113 = vcmp.eq.s32.totalorder %v1058, %v1080
        %vm1114 = vcmp.eq.s32.totalorder %v1058, %v1084
        %vm1115 = vcmp.eq.s32.totalorder %v1059, %v1080
        %vm1116 = vcmp.eq.s32.totalorder %v1059, %v1084
        %vm1117 = vcmp.eq.s32.totalorder %v1060, %v1080
        %vm1118 = vcmp.eq.s32.totalorder %v1060, %v1084
        %vm1119 = vcmp.eq.s32.totalorder %v1061, %v1080
        %vm1120 = vcmp.eq.s32.totalorder %v1061, %v1084
        %vm1121 = vcmp.eq.s32.totalorder %v1062, %v1080
        %vm1122 = vcmp.eq.s32.totalorder %v1062, %v1084
        %vm1123 = vcmp.eq.s32.totalorder %v1063, %v1080
        %vm1124 = vcmp.eq.s32.totalorder %v1063, %v1084
        %vm1125 = vcmp.eq.s32.totalorder %v1064, %v1080
        %vm1126 = vcmp.eq.s32.totalorder %v1064, %v1084
        %vm1127 = vcmp.eq.s32.totalorder %v1065, %v1080
        %vm1128 = vcmp.eq.s32.totalorder %v1065, %v1084
        %vm1129 = vcmp.eq.s32.totalorder %v1066, %v1080
        %vm1130 = vcmp.eq.s32.totalorder %v1066, %v1084
        %vm1131 = vcmp.eq.s32.totalorder %v1067, %v1080
        %vm1132 = vcmp.eq.s32.totalorder %v1067, %v1084
        %vm1133 = vcmp.eq.s32.totalorder %v1068, %v1080
        %vm1134 = vcmp.eq.s32.totalorder %v1068, %v1084
        %vm1135 = vcmp.eq.s32.totalorder %v1069, %v1080
        %vm1136 = vcmp.eq.s32.totalorder %v1069, %v1084
        %vm1137 = vcmp.eq.s32.totalorder %v1070, %v1080
        %vm1138 = vcmp.eq.s32.totalorder %v1070, %v1084
        %vm1139 = vcmp.eq.s32.totalorder %v1071, %v1080
        %vm1140 = vcmp.eq.s32.totalorder %v1071, %v1084
        %vm1141 = vcmp.eq.s32.totalorder %v1072, %v1080
        %vm1142 = vcmp.eq.s32.totalorder %v1072, %v1084
        %vm1143 = vcmp.eq.s32.totalorder %v1073, %v1080
        %vm1144 = vcmp.eq.s32.totalorder %v1073, %v1084
        %vm1145 = vcmp.eq.s32.totalorder %v1074, %v1080
        %vm1146 = vcmp.eq.s32.totalorder %v1074, %v1084
        %vm1147 = vcmp.eq.s32.totalorder %v1075, %v1080
        %vm1148 = vcmp.eq.s32.totalorder %v1075, %v1084
        %v1149 = vsel %vm1085, %v881, 0.0
        %v1150 = vsel %vm1086, %v883, 0.0
        %v1151 = vsel %vm1087, %v885, 0.0
        %v1152 = vsel %vm1088, %v887, 0.0
        %v1153 = vsel %vm1089, %v891, 0.0
        %v1154 = vsel %vm1090, %v893, 0.0
        %v1155 = vsel %vm1091, %v895, 0.0
        %v1156 = vsel %vm1092, %v897, 0.0
        %v1157 = vsel %vm1093, %v901, 0.0
        %v1158 = vsel %vm1094, %v903, 0.0
        %v1159 = vsel %vm1095, %v905, 0.0
        %v1160 = vsel %vm1096, %v907, 0.0
        %v1161 = vsel %vm1097, %v911, 0.0
        %v1162 = vsel %vm1098, %v913, 0.0
        %v1163 = vsel %vm1099, %v915, 0.0
        %v1164 = vsel %vm1100, %v917, 0.0
        %v1165 = vsel %vm1101, %v921, 0.0
        %v1166 = vsel %vm1102, %v923, 0.0
        %v1167 = vsel %vm1103, %v925, 0.0
        %v1168 = vsel %vm1104, %v927, 0.0
        %v1169 = vsel %vm1105, %v931, 0.0
        %v1170 = vsel %vm1106, %v933, 0.0
        %v1171 = vsel %vm1107, %v935, 0.0
        %v1172 = vsel %vm1108, %v937, 0.0
        %v1173 = vsel %vm1109, %v941, 0.0
        %v1174 = vsel %vm1110, %v943, 0.0
        %v1175 = vsel %vm1111, %v945, 0.0
        %v1176 = vsel %vm1112, %v947, 0.0
        %v1177 = vsel %vm1113, %v951, 0.0
        %v1178 = vsel %vm1114, %v953, 0.0
        %v1179 = vsel %vm1115, %v955, 0.0
        %v1180 = vsel %vm1116, %v957, 0.0
        %v1181 = vsel %vm1117, %v961, 0.0
        %v1182 = vsel %vm1118, %v963, 0.0
        %v1183 = vsel %vm1119, %v965, 0.0
        %v1184 = vsel %vm1120, %v967, 0.0
        %v1185 = vsel %vm1121, %v971, 0.0
        %v1186 = vsel %vm1122, %v973, 0.0
        %v1187 = vsel %vm1123, %v975, 0.0
        %v1188 = vsel %vm1124, %v977, 0.0
        %v1189 = vsel %vm1125, %v981, 0.0
        %v1190 = vsel %vm1126, %v983, 0.0
        %v1191 = vsel %vm1127, %v985, 0.0
        %v1192 = vsel %vm1128, %v987, 0.0
        %v1193 = vsel %vm1129, %v991, 0.0
        %v1194 = vsel %vm1130, %v993, 0.0
        %v1195 = vsel %vm1131, %v995, 0.0
        %v1196 = vsel %vm1132, %v997, 0.0
        %v1197 = vsel %vm1133, %v1001, 0.0
        %v1198 = vsel %vm1134, %v1003, 0.0
        %v1199 = vsel %vm1135, %v1005, 0.0
        %v1200 = vsel %vm1136, %v1007, 0.0
        %v1201 = vsel %vm1137, %v1011, 0.0
        %v1202 = vsel %vm1138, %v1013, 0.0
        %v1203 = vsel %vm1139, %v1015, 0.0
        %v1204 = vsel %vm1140, %v1017, 0.0
        %v1205 = vsel %vm1141, %v1021, 0.0
        %v1206 = vsel %vm1142, %v1023, 0.0
        %v1207 = vsel %vm1143, %v1025, 0.0
        %v1208 = vsel %vm1144, %v1027, 0.0
        %v1209 = vsel %vm1145, %v1031, 0.0
        %v1210 = vsel %vm1146, %v1033, 0.0
        %v1211 = vsel %vm1147, %v1035, 0.0
        %v1212 = vsel %vm1148, %v1037, 0.0
        %v1213 = vadd.f32 %v1149, %v1151
        %v1214 = vadd.f32 %v1213, %v1153
        %v1215 = vadd.f32 %v1214, %v1155
        %v1216 = vadd.f32 %v1215, %v1157
        %v1217 = vadd.f32 %v1216, %v1159
        %v1218 = vadd.f32 %v1217, %v1161
        %v1219 = vadd.f32 %v1218, %v1163
        %v1220 = vadd.f32 %v1219, %v1165
        %v1221 = vadd.f32 %v1220, %v1167
        %v1222 = vadd.f32 %v1221, %v1169
        %v1223 = vadd.f32 %v1222, %v1171
        %v1224 = vadd.f32 %v1223, %v1173
        %v1225 = vadd.f32 %v1224, %v1175
        %v1226 = vadd.f32 %v1225, %v1177
        %v1227 = vadd.f32 %v1226, %v1179
        %v1228 = vadd.f32 %v1227, %v1181
        %v1229 = vadd.f32 %v1228, %v1183
        %v1230 = vadd.f32 %v1229, %v1185
        %v1231 = vadd.f32 %v1230, %v1187
        %v1232 = vadd.f32 %v1231, %v1189
        %v1233 = vadd.f32 %v1232, %v1191
        %v1234 = vadd.f32 %v1233, %v1193
        %v1235 = vadd.f32 %v1234, %v1195
        %v1236 = vadd.f32 %v1235, %v1197
        %v1237 = vadd.f32 %v1236, %v1199
        %v1238 = vadd.f32 %v1237, %v1201
        %v1239 = vadd.f32 %v1238, %v1203
        %v1240 = vadd.f32 %v1239, %v1205
        %v1241 = vadd.f32 %v1240, %v1207
        %v1242 = vadd.f32 %v1241, %v1209
        %v1243 = vadd.f32 %v1242, %v1211
        %v1244 = vrot.slane %v1243, 4
        %v1245 = vadd.f32 %v1243, %v1244
        %v1246 = vrot.slane %v1245, 2
        %v1247 = vadd.f32 %v1245, %v1246
        %v1248 = vrot.slane %v1247, 1
        %v1249 = vadd.f32 %v1247, %v1248
        %v1250 = vadd.f32 %v1150, %v1152
        %v1251 = vadd.f32 %v1250, %v1154
        %v1252 = vadd.f32 %v1251, %v1156
        %v1253 = vadd.f32 %v1252, %v1158
        %v1254 = vadd.f32 %v1253, %v1160
        %v1255 = vadd.f32 %v1254, %v1162
        %v1256 = vadd.f32 %v1255, %v1164
        %v1257 = vadd.f32 %v1256, %v1166
        %v1258 = vadd.f32 %v1257, %v1168
        %v1259 = vadd.f32 %v1258, %v1170
        %v1260 = vadd.f32 %v1259, %v1172
        %v1261 = vadd.f32 %v1260, %v1174
        %v1262 = vadd.f32 %v1261, %v1176
        %v1263 = vadd.f32 %v1262, %v1178
        %v1264 = vadd.f32 %v1263, %v1180
        %v1265 = vadd.f32 %v1264, %v1182
        %v1266 = vadd.f32 %v1265, %v1184
        %v1267 = vadd.f32 %v1266, %v1186
        %v1268 = vadd.f32 %v1267, %v1188
        %v1269 = vadd.f32 %v1268, %v1190
        %v1270 = vadd.f32 %v1269, %v1192
        %v1271 = vadd.f32 %v1270, %v1194
        %v1272 = vadd.f32 %v1271, %v1196
        %v1273 = vadd.f32 %v1272, %v1198
        %v1274 = vadd.f32 %v1273, %v1200
        %v1275 = vadd.f32 %v1274, %v1202
        %v1276 = vadd.f32 %v1275, %v1204
        %v1277 = vadd.f32 %v1276, %v1206
        %v1278 = vadd.f32 %v1277, %v1208
        %v1279 = vadd.f32 %v1278, %v1210
        %v1280 = vadd.f32 %v1279, %v1212
        %v1281 = vrot.slane %v1280, 4
        %v1282 = vadd.f32 %v1280, %v1281
        %v1283 = vrot.slane %v1282, 2
        %v1284 = vadd.f32 %v1282, %v1283
        %v1285 = vrot.slane %v1284, 1
        %v1286 = vadd.f32 %v1284, %v1285
        %v1289 = vcombine.low %v1249, %v1286
        %v1291 = vunpack.c.l.s4 1966171168
        %v1292 = vunpack.c.0.s8 %v1291
        %v1293 = vlaneseq
        %v1294 = vshrl.u32 %v1293, 7
        %v1295 = vsub.s32 %v1292, %v1294
        %v1296 = vrot.slane %v1289, %v1295
        %v1298 = vunpack.c.l.s4 1966171168
        %v1299 = vunpack.c.0.s8 %v1298
        %v1300 = vlaneseq
        %v1301 = vshrl.u32 %v1300, 7
        %v1302 = vsub.s32 %v1299, %v1301
        %v1303 = vrot.slane %v1296, %v1302
        %v1305 = vadd.f32 %v1076, %v1303
        %v1306 = vlaneseq
        %vm1307 = vcmp.ge.s32.totalorder %v1306, 0
        %vm1308 = vcmp.lt.s32.totalorder %v1306, 256
        %vm1309 = vmand %vm1307, %vm1308
        %1310 = vst.msk [vmem:[#allocation4] sm:$0x3] %vm1309, %v1305
        %v1311 = vld [vmem:[#allocation2] sm:$0x3]
        %v1312 = vmax.f32 %v881, %v891
        %v1313 = vmax.f32 %v885, %v895
        %v1314 = vmax.f32 %v1312, %v901
        %v1315 = vmax.f32 %v1313, %v905
        %v1316 = vmax.f32 %v1314, %v911
        %v1317 = vmax.f32 %v1315, %v915
        %v1318 = vmax.f32 %v1316, %v921
        %v1319 = vmax.f32 %v1317, %v925
        %v1320 = vmax.f32 %v1318, %v931
        %v1321 = vmax.f32 %v1319, %v935
        %v1322 = vmax.f32 %v1320, %v941
        %v1323 = vmax.f32 %v1321, %v945
        %v1324 = vmax.f32 %v1322, %v951
        %v1325 = vmax.f32 %v1323, %v955
        %v1326 = vmax.f32 %v1324, %v961
        %v1327 = vmax.f32 %v1325, %v965
        %v1328 = vmax.f32 %v1326, %v971
        %v1329 = vmax.f32 %v1327, %v975
        %v1330 = vmax.f32 %v1328, %v981
        %v1331 = vmax.f32 %v1329, %v985
        %v1332 = vmax.f32 %v1330, %v991
        %v1333 = vmax.f32 %v1331, %v995
        %v1334 = vmax.f32 %v1332, %v1001
        %v1335 = vmax.f32 %v1333, %v1005
        %v1336 = vmax.f32 %v1334, %v1011
        %v1337 = vmax.f32 %v1335, %v1015
        %v1338 = vmax.f32 %v1336, %v1021
        %v1339 = vmax.f32 %v1337, %v1025
        %v1340 = vmax.f32 %v1338, %v1031
        %v1341 = vmax.f32 %v1339, %v1035
        %v1342 = vmax.f32 %v1340, %v1341
        %v1343 = vrot.slane %v1342, 4
        %v1344 = vmax.f32 %v1342, %v1343
        %v1345 = vrot.slane %v1344, 2
        %v1346 = vmax.f32 %v1344, %v1345
        %v1347 = vrot.slane %v1346, 1
        %v1348 = vmax.f32 %v1346, %v1347
        %v1349 = vmax.f32 %v883, %v893
        %v1350 = vmax.f32 %v887, %v897
        %v1351 = vmax.f32 %v1349, %v903
        %v1352 = vmax.f32 %v1350, %v907
        %v1353 = vmax.f32 %v1351, %v913
        %v1354 = vmax.f32 %v1352, %v917
        %v1355 = vmax.f32 %v1353, %v923
        %v1356 = vmax.f32 %v1354, %v927
        %v1357 = vmax.f32 %v1355, %v933
        %v1358 = vmax.f32 %v1356, %v937
        %v1359 = vmax.f32 %v1357, %v943
        %v1360 = vmax.f32 %v1358, %v947
        %v1361 = vmax.f32 %v1359, %v953
        %v1362 = vmax.f32 %v1360, %v957
        %v1363 = vmax.f32 %v1361, %v963
        %v1364 = vmax.f32 %v1362, %v967
        %v1365 = vmax.f32 %v1363, %v973
        %v1366 = vmax.f32 %v1364, %v977
        %v1367 = vmax.f32 %v1365, %v983
        %v1368 = vmax.f32 %v1366, %v987
        %v1369 = vmax.f32 %v1367, %v993
        %v1370 = vmax.f32 %v1368, %v997
        %v1371 = vmax.f32 %v1369, %v1003
        %v1372 = vmax.f32 %v1370, %v1007
        %v1373 = vmax.f32 %v1371, %v1013
        %v1374 = vmax.f32 %v1372, %v1017
        %v1375 = vmax.f32 %v1373, %v1023
        %v1376 = vmax.f32 %v1374, %v1027
        %v1377 = vmax.f32 %v1375, %v1033
        %v1378 = vmax.f32 %v1376, %v1037
        %v1379 = vmax.f32 %v1377, %v1378
        %v1380 = vrot.slane %v1379, 4
        %v1381 = vmax.f32 %v1379, %v1380
        %v1382 = vrot.slane %v1381, 2
        %v1383 = vmax.f32 %v1381, %v1382
        %v1384 = vrot.slane %v1383, 1
        %v1385 = vmax.f32 %v1383, %v1384
        %v1388 = vcombine.low %v1348, %v1385
        %v1390 = vunpack.c.l.s4 1966171168
        %v1391 = vunpack.c.0.s8 %v1390
        %v1392 = vlaneseq
        %v1393 = vshrl.u32 %v1392, 7
        %v1394 = vsub.s32 %v1391, %v1393
        %v1395 = vrot.slane %v1388, %v1394
        %v1397 = vunpack.c.l.s4 1966171168
        %v1398 = vunpack.c.0.s8 %v1397
        %v1399 = vlaneseq
        %v1400 = vshrl.u32 %v1399, 7
        %v1401 = vsub.s32 %v1398, %v1400
        %v1402 = vrot.slane %v1395, %v1401
        %v1404 = vmax.f32 %v1311, %v1402
        %v1405 = vld [vmem:[#allocation3] sm:$0x3]
        %v1406 = vsub.f32 %v1311, %v1404
        %v1407 = vmul.f32 %v1406, 1.442695
        %v1408 = vpow.pop %v1407
        %v1409 = vmul.f32 %v1405, %v1408
        %v1411 = vlaneseq
        %v1412 = vshrl.u32 %v1411, 7
        %v1413 = vsub.s32 0, %v1412
        %v1414 = vrot.slane %v1404, %v1413
        %v1415 = vlaneseq
        %v1416 = vshrl.u32 %v1415, 7
        %v1417 = vsub.s32 1, %v1416
        %v1418 = vrot.slane %v1404, %v1417
        %v1421 = vsub.f32 %v881, %v1414
        %v1422 = vsub.f32 %v883, %v1418
        %v1423 = vsub.f32 %v885, %v1414
        %v1424 = vsub.f32 %v887, %v1418
        %v1425 = vsub.f32 %v891, %v1414
        %v1426 = vsub.f32 %v893, %v1418
        %v1427 = vsub.f32 %v895, %v1414
        %v1428 = vsub.f32 %v897, %v1418
        %v1429 = vsub.f32 %v901, %v1414
        %v1430 = vsub.f32 %v903, %v1418
        %v1431 = vsub.f32 %v905, %v1414
        %v1432 = vsub.f32 %v907, %v1418
        %v1433 = vsub.f32 %v911, %v1414
        %v1434 = vsub.f32 %v913, %v1418
        %v1435 = vsub.f32 %v915, %v1414
        %v1436 = vsub.f32 %v917, %v1418
        %v1437 = vsub.f32 %v921, %v1414
        %v1438 = vsub.f32 %v923, %v1418
        %v1439 = vsub.f32 %v925, %v1414
        %v1440 = vsub.f32 %v927, %v1418
        %v1441 = vsub.f32 %v931, %v1414
        %v1442 = vsub.f32 %v933, %v1418
        %v1443 = vsub.f32 %v935, %v1414
        %v1444 = vsub.f32 %v937, %v1418
        %v1445 = vsub.f32 %v941, %v1414
        %v1446 = vsub.f32 %v943, %v1418
        %v1447 = vsub.f32 %v945, %v1414
        %v1448 = vsub.f32 %v947, %v1418
        %v1449 = vsub.f32 %v951, %v1414
        %v1450 = vsub.f32 %v953, %v1418
        %v1451 = vsub.f32 %v955, %v1414
        %v1452 = vsub.f32 %v957, %v1418
        %v1453 = vsub.f32 %v961, %v1414
        %v1454 = vsub.f32 %v963, %v1418
        %v1455 = vsub.f32 %v965, %v1414
        %v1456 = vsub.f32 %v967, %v1418
        %v1457 = vsub.f32 %v971, %v1414
        %v1458 = vsub.f32 %v973, %v1418
        %v1459 = vsub.f32 %v975, %v1414
        %v1460 = vsub.f32 %v977, %v1418
        %v1461 = vsub.f32 %v981, %v1414
        %v1462 = vsub.f32 %v983, %v1418
        %v1463 = vsub.f32 %v985, %v1414
        %v1464 = vsub.f32 %v987, %v1418
        %v1465 = vsub.f32 %v991, %v1414
        %v1466 = vsub.f32 %v993, %v1418
        %v1467 = vsub.f32 %v995, %v1414
        %v1468 = vsub.f32 %v997, %v1418
        %v1469 = vsub.f32 %v1001, %v1414
        %v1470 = vsub.f32 %v1003, %v1418
        %v1471 = vsub.f32 %v1005, %v1414
        %v1472 = vsub.f32 %v1007, %v1418
        %v1473 = vsub.f32 %v1011, %v1414
        %v1474 = vsub.f32 %v1013, %v1418
        %v1475 = vsub.f32 %v1015, %v1414
        %v1476 = vsub.f32 %v1017, %v1418
        %v1477 = vsub.f32 %v1021, %v1414
        %v1478 = vsub.f32 %v1023, %v1418
        %v1479 = vsub.f32 %v1025, %v1414
        %v1480 = vsub.f32 %v1027, %v1418
        %v1481 = vsub.f32 %v1031, %v1414
        %v1482 = vsub.f32 %v1033, %v1418
        %v1483 = vsub.f32 %v1035, %v1414
        %v1484 = vsub.f32 %v1037, %v1418
        %v1485 = vmul.f32 %v1421, 1.442695
        %v1486 = vpow.pop %v1485
        %v1487 = vmul.f32 %v1422, 1.442695
        %v1488 = vpow.pop %v1487
        %v1489 = vmul.f32 %v1423, 1.442695
        %v1490 = vpow.pop %v1489
        %v1491 = vmul.f32 %v1424, 1.442695
        %v1492 = vpow.pop %v1491
        %v1493 = vmul.f32 %v1425, 1.442695
        %v1494 = vpow.pop %v1493
        %v1495 = vmul.f32 %v1426, 1.442695
        %v1496 = vpow.pop %v1495
        %v1497 = vmul.f32 %v1427, 1.442695
        %v1498 = vpow.pop %v1497
        %v1499 = vmul.f32 %v1428, 1.442695
        %v1500 = vpow.pop %v1499
        %v1501 = vmul.f32 %v1429, 1.442695
        %v1502 = vpow.pop %v1501
        %v1503 = vmul.f32 %v1430, 1.442695
        %v1504 = vpow.pop %v1503
        %v1505 = vmul.f32 %v1431, 1.442695
        %v1506 = vpow.pop %v1505
        %v1507 = vmul.f32 %v1432, 1.442695
        %v1508 = vpow.pop %v1507
        %v1509 = vmul.f32 %v1433, 1.442695
        %v1510 = vpow.pop %v1509
        %v1511 = vmul.f32 %v1434, 1.442695
        %v1512 = vpow.pop %v1511
        %v1513 = vmul.f32 %v1435, 1.442695
        %v1514 = vpow.pop %v1513
        %v1515 = vmul.f32 %v1436, 1.442695
        %v1516 = vpow.pop %v1515
        %v1517 = vmul.f32 %v1437, 1.442695
        %v1518 = vpow.pop %v1517
        %v1519 = vmul.f32 %v1438, 1.442695
        %v1520 = vpow.pop %v1519
        %v1521 = vmul.f32 %v1439, 1.442695
        %v1522 = vpow.pop %v1521
        %v1523 = vmul.f32 %v1440, 1.442695
        %v1524 = vpow.pop %v1523
        %v1525 = vmul.f32 %v1441, 1.442695
        %v1526 = vpow.pop %v1525
        %v1527 = vmul.f32 %v1442, 1.442695
        %v1528 = vpow.pop %v1527
        %v1529 = vmul.f32 %v1443, 1.442695
        %v1530 = vpow.pop %v1529
        %v1531 = vmul.f32 %v1444, 1.442695
        %v1532 = vpow.pop %v1531
        %v1533 = vmul.f32 %v1445, 1.442695
        %v1534 = vpow.pop %v1533
        %v1535 = vmul.f32 %v1446, 1.442695
        %v1536 = vpow.pop %v1535
        %v1537 = vmul.f32 %v1447, 1.442695
        %v1538 = vpow.pop %v1537
        %v1539 = vmul.f32 %v1448, 1.442695
        %v1540 = vpow.pop %v1539
        %v1541 = vmul.f32 %v1449, 1.442695
        %v1542 = vpow.pop %v1541
        %v1543 = vmul.f32 %v1450, 1.442695
        %v1544 = vpow.pop %v1543
        %v1545 = vmul.f32 %v1451, 1.442695
        %v1546 = vpow.pop %v1545
        %v1547 = vmul.f32 %v1452, 1.442695
        %v1548 = vpow.pop %v1547
        %v1549 = vmul.f32 %v1453, 1.442695
        %v1550 = vpow.pop %v1549
        %v1551 = vmul.f32 %v1454, 1.442695
        %v1552 = vpow.pop %v1551
        %v1553 = vmul.f32 %v1455, 1.442695
        %v1554 = vpow.pop %v1553
        %v1555 = vmul.f32 %v1456, 1.442695
        %v1556 = vpow.pop %v1555
        %v1557 = vmul.f32 %v1457, 1.442695
        %v1558 = vpow.pop %v1557
        %v1559 = vmul.f32 %v1458, 1.442695
        %v1560 = vpow.pop %v1559
        %v1561 = vmul.f32 %v1459, 1.442695
        %v1562 = vpow.pop %v1561
        %v1563 = vmul.f32 %v1460, 1.442695
        %v1564 = vpow.pop %v1563
        %v1565 = vmul.f32 %v1461, 1.442695
        %v1566 = vpow.pop %v1565
        %v1567 = vmul.f32 %v1462, 1.442695
        %v1568 = vpow.pop %v1567
        %v1569 = vmul.f32 %v1463, 1.442695
        %v1570 = vpow.pop %v1569
        %v1571 = vmul.f32 %v1464, 1.442695
        %v1572 = vpow.pop %v1571
        %v1573 = vmul.f32 %v1465, 1.442695
        %v1574 = vpow.pop %v1573
        %v1575 = vmul.f32 %v1466, 1.442695
        %v1576 = vpow.pop %v1575
        %v1577 = vmul.f32 %v1467, 1.442695
        %v1578 = vpow.pop %v1577
        %v1579 = vmul.f32 %v1468, 1.442695
        %v1580 = vpow.pop %v1579
        %v1581 = vmul.f32 %v1469, 1.442695
        %v1582 = vpow.pop %v1581
        %v1583 = vmul.f32 %v1470, 1.442695
        %v1584 = vpow.pop %v1583
        %v1585 = vmul.f32 %v1471, 1.442695
        %v1586 = vpow.pop %v1585
        %v1587 = vmul.f32 %v1472, 1.442695
        %v1588 = vpow.pop %v1587
        %v1589 = vmul.f32 %v1473, 1.442695
        %v1590 = vpow.pop %v1589
        %v1591 = vmul.f32 %v1474, 1.442695
        %v1592 = vpow.pop %v1591
        %v1593 = vmul.f32 %v1475, 1.442695
        %v1594 = vpow.pop %v1593
        %v1595 = vmul.f32 %v1476, 1.442695
        %v1596 = vpow.pop %v1595
        %v1597 = vmul.f32 %v1477, 1.442695
        %v1598 = vpow.pop %v1597
        %v1599 = vmul.f32 %v1478, 1.442695
        %v1600 = vpow.pop %v1599
        %v1601 = vmul.f32 %v1479, 1.442695
        %v1602 = vpow.pop %v1601
        %v1603 = vmul.f32 %v1480, 1.442695
        %v1604 = vpow.pop %v1603
        %v1605 = vmul.f32 %v1481, 1.442695
        %v1606 = vpow.pop %v1605
        %v1607 = vmul.f32 %v1482, 1.442695
        %v1608 = vpow.pop %v1607
        %v1609 = vmul.f32 %v1483, 1.442695
        %v1610 = vpow.pop %v1609
        %v1611 = vmul.f32 %v1484, 1.442695
        %v1612 = vpow.pop %v1611
        %v1613 = vadd.f32 %v1486, %v1490
        %v1614 = vadd.f32 %v1613, %v1494
        %v1615 = vadd.f32 %v1614, %v1498
        %v1616 = vadd.f32 %v1615, %v1502
        %v1617 = vadd.f32 %v1616, %v1506
        %v1618 = vadd.f32 %v1617, %v1510
        %v1619 = vadd.f32 %v1618, %v1514
        %v1620 = vadd.f32 %v1619, %v1518
        %v1621 = vadd.f32 %v1620, %v1522
        %v1622 = vadd.f32 %v1621, %v1526
        %v1623 = vadd.f32 %v1622, %v1530
        %v1624 = vadd.f32 %v1623, %v1534
        %v1625 = vadd.f32 %v1624, %v1538
        %v1626 = vadd.f32 %v1625, %v1542
        %v1627 = vadd.f32 %v1626, %v1546
        %v1628 = vadd.f32 %v1627, %v1550
        %v1629 = vadd.f32 %v1628, %v1554
        %v1630 = vadd.f32 %v1629, %v1558
        %v1631 = vadd.f32 %v1630, %v1562
        %v1632 = vadd.f32 %v1631, %v1566
        %v1633 = vadd.f32 %v1632, %v1570
        %v1634 = vadd.f32 %v1633, %v1574
        %v1635 = vadd.f32 %v1634, %v1578
        %v1636 = vadd.f32 %v1635, %v1582
        %v1637 = vadd.f32 %v1636, %v1586
        %v1638 = vadd.f32 %v1637, %v1590
        %v1639 = vadd.f32 %v1638, %v1594
        %v1640 = vadd.f32 %v1639, %v1598
        %v1641 = vadd.f32 %v1640, %v1602
        %v1642 = vadd.f32 %v1641, %v1606
        %v1643 = vadd.f32 %v1642, %v1610
        %v1644 = vrot.slane %v1643, 4
        %v1645 = vadd.f32 %v1643, %v1644
        %v1646 = vrot.slane %v1645, 2
        %v1647 = vadd.f32 %v1645, %v1646
        %v1648 = vrot.slane %v1647, 1
        %v1649 = vadd.f32 %v1647, %v1648
        %v1650 = vadd.f32 %v1488, %v1492
        %v1651 = vadd.f32 %v1650, %v1496
        %v1652 = vadd.f32 %v1651, %v1500
        %v1653 = vadd.f32 %v1652, %v1504
        %v1654 = vadd.f32 %v1653, %v1508
        %v1655 = vadd.f32 %v1654, %v1512
        %v1656 = vadd.f32 %v1655, %v1516
        %v1657 = vadd.f32 %v1656, %v1520
        %v1658 = vadd.f32 %v1657, %v1524
        %v1659 = vadd.f32 %v1658, %v1528
        %v1660 = vadd.f32 %v1659, %v1532
        %v1661 = vadd.f32 %v1660, %v1536
        %v1662 = vadd.f32 %v1661, %v1540
        %v1663 = vadd.f32 %v1662, %v1544
        %v1664 = vadd.f32 %v1663, %v1548
        %v1665 = vadd.f32 %v1664, %v1552
        %v1666 = vadd.f32 %v1665, %v1556
        %v1667 = vadd.f32 %v1666, %v1560
        %v1668 = vadd.f32 %v1667, %v1564
        %v1669 = vadd.f32 %v1668, %v1568
        %v1670 = vadd.f32 %v1669, %v1572
        %v1671 = vadd.f32 %v1670, %v1576
        %v1672 = vadd.f32 %v1671, %v1580
        %v1673 = vadd.f32 %v1672, %v1584
        %v1674 = vadd.f32 %v1673, %v1588
        %v1675 = vadd.f32 %v1674, %v1592
        %v1676 = vadd.f32 %v1675, %v1596
        %v1677 = vadd.f32 %v1676, %v1600
        %v1678 = vadd.f32 %v1677, %v1604
        %v1679 = vadd.f32 %v1678, %v1608
        %v1680 = vadd.f32 %v1679, %v1612
        %v1681 = vrot.slane %v1680, 4
        %v1682 = vadd.f32 %v1680, %v1681
        %v1683 = vrot.slane %v1682, 2
        %v1684 = vadd.f32 %v1682, %v1683
        %v1685 = vrot.slane %v1684, 1
        %v1686 = vadd.f32 %v1684, %v1685
        %v1689 = vcombine.low %v1649, %v1686
        %v1691 = vunpack.c.l.s4 1966171168
        %v1692 = vunpack.c.0.s8 %v1691
        %v1693 = vlaneseq
        %v1694 = vshrl.u32 %v1693, 7
        %v1695 = vsub.s32 %v1692, %v1694
        %v1696 = vrot.slane %v1689, %v1695
        %v1698 = vunpack.c.l.s4 1966171168
        %v1699 = vunpack.c.0.s8 %v1698
        %v1700 = vlaneseq
        %v1701 = vshrl.u32 %v1700, 7
        %v1702 = vsub.s32 %v1699, %v1701
        %v1703 = vrot.slane %v1696, %v1702
        %v1705 = vadd.f32 %v1409, %v1703
        %1706 = vst.msk [vmem:[#allocation3] sm:$0x3] %vm1309, %v1705
        %1707 = vst.msk [vmem:[#allocation2] sm:$0x3] %vm1309, %v1404
        %p1708 = scmp.eq.s32.totalorder %s22, 3
        // Predicated region
        $region79: #{spin_forward.1} parent=69 // pred_check
          %p1709 = pneg %p1708
        $region80: #{spin_forward.1} parent=69 // pred_check_branch
          %1711 = sbr.rel (%p1709) target = $region82
        $region81: #{spin_forward.1} parent=69 // pred_region
          %v1712 = vld [vmem:[#allocation2] sm:$0x3]
          %v1713 = vld [vmem:[#allocation3] sm:$0x3]
          %v1714 = vlog2.pop %v1713
          %v1715 = vmul.f32 %v1714, 0.6931472
          %v1716 = vadd.f32 %v1712, %v1715
          %v1717 = vld [vmem:[#allocation4] sm:$0x3]
          %v1718 = vsub.f32 %v1717, %v1716
          %v1720 = vlaneseq
          %v1721 = vshrl.u32 %v1720, 7
          %v1722 = vsub.s32 0, %v1721
          %v1723 = vrot.slane %v1718, %v1722
          %v1724 = vlaneseq
          %v1725 = vshrl.u32 %v1724, 7
          %v1726 = vsub.s32 1, %v1725
          %v1727 = vrot.slane %v1718, %v1726
          %1730 = vst [vmem:[%s417] sm:$0xff] %v1723
          %1731 = vst [vmem:[%s417 + $0x8] sm:$0xff] %v1727
        $region82: #{spin_forward.1} parent=69 // pred_fallthru
          _
        %p1732 = scmp.lt.s32.totalorder %s20, 1
        %s1733 = scalar_select %p1732, %s20, 1
        %p1734 = scmp.lt.s32.totalorder %s21, 1
        %s1735 = scalar_select %p1734, %s21, 1
        %s1736 = smul.addr %s1735, 2
        %s1737 = smul.addr %s1733, 4
        %s1738 = sadd.s32 %s1736, %s1737
        %s1739 = smul.addr %s1738, 8
        %s1740 = scalar_lea.vmem %s4, %s1739
        // Predicated region
        $region83: #{spin_forward.1} parent=69 // pred_check
          %p1741 = pneg %p164
        $region84: #{spin_forward.1} parent=69 // pred_check_branch
          %1743 = sbr.rel (%p1741) target = $region86
        $region85: #{spin_forward.1} parent=69 // pred_region
          _
        $region86: #{spin_forward.1} parent=69 // pred_fallthru
          _
      $region70: #{spin_forward.1} parent=5 // pred_fallthru
        _
      %p1744 = scmp.le.s32.totalorder 2, %s10
      // Predicated region
      $region87: #{spin_forward.1} parent=5 // pred_check
        %p1745 = pneg %p1744
      $region88: #{spin_forward.1} parent=5 // pred_check_branch
        %1747 = sbr.rel (%p1745) target = $region90
      $region89: #{spin_forward.1} parent=5 // pred_region
        %s1748 = ssub.s32 %s10, 2
        // Predicated region
        $region91: #{spin_forward.1} parent=89 // pred_check
          %p1749 = pneg %p170
        $region92: #{spin_forward.1} parent=89 // pred_check_branch
          %1751 = sbr.rel (%p1749) target = $region94
        $region93: #{spin_forward.1} parent=89 // pred_region
          %p1752 = scmp.lt.s32.totalorder %s23, 1
          %s1753 = scalar_select %p1752, %s23, 1
          %p1754 = scmp.lt.s32.totalorder %s24, 1
          %s1755 = scalar_select %p1754, %s24, 1
          %s1756 = smul.addr %s1755, 2
          %s1757 = smul.addr %s1753, 4
          %s1758 = sadd.s32 %s1756, %s1757
          %s1759 = smul.addr %s1758, 8
          %s1760 = scalar_lea.vmem %s4, %s1759
        $region94: #{spin_forward.1} parent=89 // pred_fallthru
          _
      $region90: #{spin_forward.1} parent=5 // pred_fallthru
        _
    $region6: #{spin_forward.1} parent=1 // loop_footer
      %s14 = sadd.s32 1, %s10
    $region7: #{spin_forward.1} parent=1 // loop_footer_branch
      %9 = sbr.rel target = $region3
    $region8: #{spin_forward.1} parent=1 // loop_exit
      _

</llo_original>
